<compile_context>
chip_gen: v7x
topology: tpu7x:2x2x1
jax: 0.10.0
libtpu: 0.0.40
codegen_flags: <defaults>
</compile_context>

<pallas_src>
import jax
import jax.numpy as jnp
from jax.experimental import pallas as pl
from jax.experimental.pallas import tpu as pltpu

# ---------------- configuration (small, consistent with the module) --------
PAD_IDX = 0
VOCAB_SIZE = 20
EMBEDDING_SIZE = 8
ENCODING_HIDDEN_SIZE = 16          # H
NUM_ENCODING_LAYERS = 1
ATTENTION_INTERMEDIATE_SIZE = 16   # A
NUM_ATTENTION_HEADS = 2            # NH
OUTPUT_SIZE = 2                    # O
BATCH = 2
MAX_LEN = 8                        # T


# ----------------------- the single fused Pallas kernel ---------------------
def _eeap_fused_kernel(len_ref, lenv_ref, tokf_ref, tokb_ref, wbig_ref, whh_ref,
                       bias_ref, w1_ref, b1_ref, w2_ref, b2_ref, wpk_ref, bp_ref,
                       out_ref, xp_scr, enc_scr):
    B, T = BATCH, MAX_LEN
    V, H = VOCAB_SIZE, ENCODING_HIDDEN_SIZE
    H2 = 2 * H                      # fused [fwd | bwd] state width
    NH, O = NUM_ATTENTION_HEADS, OUTPUT_SIZE
    f32 = jnp.float32

    # ---- embedding folded into input projection: ONE one-hot MXU matmul ----
    # wbig rows [0:V]  = emb @ Wih_fwd  (token at time s)
    # wbig rows [V:2V] = emb @ Wih_bwd  (token at time T-1-s; wrapper adds +V)
    iota2v = jax.lax.broadcasted_iota(jnp.int32, (T * B, 2 * V), 1)
    onehot = ((iota2v == tokf_ref[...]) | (iota2v == tokb_ref[...])).astype(f32)
    xp_scr[...] = (jnp.dot(onehot, wbig_ref[...], preferred_element_type=f32)
                   + bias_ref[...])                               # (T*B, 8H) staged in VMEM

    # ---- hoisted loop invariants ----
    whh = whh_ref[...]                                            # (2H, 8H) single load
    lenc = lenv_ref[...]                                          # (B, 1) int32 lengths
    is_fwd_col = jax.lax.broadcasted_iota(jnp.int32, (1, H2), 1) < H   # (1, 2H)

    # ---- fused bidirectional LSTM, fully unrolled, 1 recurrent matmul/step --
    # gate column layout: [i_f|i_b | f_f|f_b | g_f|g_b | o_f|o_b] (each H wide)
    # state layout:       h_cat/c_cat = [fwd H | bwd H]
    h_cat = jnp.zeros((B, H2), f32)
    c_cat = jnp.zeros((B, H2), f32)
    for s in range(T):
        gates = xp_scr[pl.ds(s * B, B), :] + jnp.dot(h_cat, whh,
                                                     preferred_element_type=f32)  # (B, 8H)
        sg = jax.nn.sigmoid(gates)                                # single EUP pass over gates
        i_g = sg[:, 0 * H2:1 * H2]
        f_g = sg[:, 1 * H2:2 * H2]
        g_g = 2.0 * sg[:, 2 * H2:3 * H2] - 1.0                    # tanh(x)=2*sigmoid(2x)-1 (2x folded in weights)
        o_g = sg[:, 3 * H2:4 * H2]
        c_new = f_g * c_cat + i_g * g_g
        h_new = o_g * jnp.tanh(c_new)
        # fwd half processes time s, bwd half processes time T-1-s
        t_here = jnp.where(is_fwd_col, s, T - 1 - s)              # (1, 2H)
        mask = t_here < lenc                                      # (B, 2H) packed-seq mask
        c_cat = jnp.where(mask, c_new, c_cat)
        h_cat = jnp.where(mask, h_new, h_cat)
        mout = jnp.where(mask, h_new, 0.0)                        # exactly 0 past length
        # batch-major staging in VMEM: enc_scr[b*T + t, :] = [h_fwd(t) | h_bwd(t)]
        for b in range(B):
            enc_scr[pl.ds(b * T + s, 1), pl.ds(0, H)] = mout[b:b + 1, 0:H]
            enc_scr[pl.ds(b * T + (T - 1 - s), 1), pl.ds(H, H)] = mout[b:b + 1, H:H2]

    # ---- attention MLP on all rows at once (two MXU calls) ------------------
    enc_all = enc_scr[...]                                        # (B*T, 2H) batch-major
    h1 = jnp.maximum(
        jnp.dot(enc_all, w1_ref[...], preferred_element_type=f32) + b1_ref[...], 0.0)  # (B*T, A)
    logits = jnp.dot(h1, w2_ref[...], preferred_element_type=f32) + b2_ref[...]        # (B*T, NH)

    # ---- masked softmax over valid positions + MXU pooling -------------------
    tpos = jax.lax.broadcasted_iota(jnp.int32, (T, 1), 0)
    att_rows = []
    for b in range(B):
        enc_b = enc_scr[pl.ds(b * T, T), :]                       # (T, 2H) contiguous load
        lg = logits[b * T:(b + 1) * T, :]                         # (T, NH)
        valid = tpos < len_ref[b]                                 # (T, 1)
        lgm = jnp.where(valid, lg, -1e30)
        m = jnp.max(lgm, axis=0, keepdims=True)                   # (1, NH)
        ex = jnp.where(valid, jnp.exp(lgm - m), 0.0)
        attw = ex / jnp.sum(ex, axis=0, keepdims=True)            # exact softmax (torch numerics)
        # weighted pooling on the MXU: attw^T @ enc_b -> (NH, 2H), head-major rows
        att_t = jax.lax.dot_general(attw, enc_b, (((0,), (0,)), ((), ())),
                                    preferred_element_type=f32)
        att_rows.append(jnp.concatenate([att_t[h:h + 1, :] for h in range(NH)], axis=1))
    att_flat = jnp.concatenate(att_rows, axis=0)                  # (B, NH*2H)

    # ---- fused prediction: ONE matmul (wpk pre-permuted to head-major order) --
    pred = jnp.dot(att_flat, wpk_ref[...], preferred_element_type=f32) + bp_ref[...]   # (B, O)

    # ---- class softmax (dim=1), exact normalization ---------------------------
    pm = jnp.max(pred, axis=1, keepdims=True)
    pe = jnp.exp(pred - pm)
    out_ref[...] = pe / jnp.sum(pe, axis=1, keepdims=True)


# --------------------------- parameter construction -------------------------
def init_params(key):
    ks = jax.random.split(key, 16)
    H, E, A = ENCODING_HIDDEN_SIZE, EMBEDDING_SIZE, ATTENTION_INTERMEDIATE_SIZE
    NH, O, V = NUM_ATTENTION_HEADS, OUTPUT_SIZE, VOCAB_SIZE

    # embedding (padding row = 0, max_norm=1.0 applied up front — see TODO)
    emb = jax.random.normal(ks[0], (V, E), jnp.float32)
    emb = emb.at[PAD_IDX].set(0.0)
    norm = jnp.linalg.norm(emb, axis=1, keepdims=True)
    emb = emb * jnp.where(norm > 1.0, 1.0 / jnp.maximum(norm, 1e-12), 1.0)

    def torch_lstm_dir(k):
        k1, k2, k3, k4 = jax.random.split(k, 4)
        wih = 0.1 * jax.random.normal(k1, (4 * H, E), jnp.float32)   # torch (4H, E), gates i,f,g,o
        whh = 0.1 * jax.random.normal(k2, (4 * H, H), jnp.float32)
        b = 0.1 * (jax.random.normal(k3, (4 * H,), jnp.float32) +
                   jax.random.normal(k4, (4 * H,), jnp.float32))     # b_ih + b_hh
        return wih, whh, b

    wih_f, whh_f, b_f = torch_lstm_dir(ks[1])
    wih_b, whh_b, b_b = torch_lstm_dir(ks[2])

    # Fused block-diagonal weights.  Column layout: [i_f|i_b|f_f|f_b|g_f|g_b|o_f|o_b].
    wih_bd = jnp.zeros((2 * E, 8 * H), jnp.float32)     # rows [0:E] fwd x, [E:2E] bwd x
    whh_bd = jnp.zeros((2 * H, 8 * H), jnp.float32)     # rows [0:H] fwd h, [H:2H] bwd h
    bias = jnp.zeros((8 * H,), jnp.float32)
    for g in range(4):
        cf = slice(g * 2 * H, g * 2 * H + H)            # fwd columns of gate g
        cb = slice(g * 2 * H + H, (g + 1) * 2 * H)      # bwd columns of gate g
        wih_bd = wih_bd.at[0:E, cf].set(wih_f[g * H:(g + 1) * H, :].T)
        wih_bd = wih_bd.at[E:2 * E, cb].set(wih_b[g * H:(g + 1) * H, :].T)
        whh_bd = whh_bd.at[0:H, cf].set(whh_f[g * H:(g + 1) * H, :].T)
        whh_bd = whh_bd.at[H:2 * H, cb].set(whh_b[g * H:(g + 1) * H, :].T)
        bias = bias.at[cf].set(b_f[g * H:(g + 1) * H])
        bias = bias.at[cb].set(b_b[g * H:(g + 1) * H])

    # tanh-from-sigmoid: pre-scale g-gate (candidate) pre-activations by 2
    gcols = slice(2 * 2 * H, 3 * 2 * H)
    wih_bd = wih_bd.at[:, gcols].multiply(2.0)
    whh_bd = whh_bd.at[:, gcols].multiply(2.0)
    bias = bias.at[gcols].multiply(2.0)

    # fold the embedding table into the input projection: (2V, 8H)
    wbig = jnp.concatenate([emb @ wih_bd[0:E, :], emb @ wih_bd[E:2 * E, :]], axis=0)

    # attention MLP (torch Linear stores (out, in); pre-transpose for the kernel)
    w1 = 0.1 * jax.random.normal(ks[3], (A, 2 * H), jnp.float32)
    b1 = 0.1 * jax.random.normal(ks[4], (A,), jnp.float32)
    w2 = 0.1 * jax.random.normal(ks[5], (NH, A), jnp.float32)
    b2 = 0.1 * jax.random.normal(ks[6], (NH,), jnp.float32)

    # prediction layer: torch Wp (O, 2H*NH) acts on the (2H, NH).view(-1) flatten
    # (feature-major, head-minor).  Kernel flattens head-major, so permute Wp:
    # wpk[h*2H + f, o] = wp[o, f*NH + h].
    wp = 0.1 * jax.random.normal(ks[7], (O, 2 * H * NH), jnp.float32)
    bp = 0.1 * jax.random.normal(ks[8], (O,), jnp.float32)
    wpk = wp.T.reshape(2 * H, NH, O).transpose(1, 0, 2).reshape(NH * 2 * H, O)

    return dict(wbig=wbig, whh=whh_bd, bias=bias.reshape(1, 8 * H),
                w1=w1.T, b1=b1.reshape(1, A), w2=w2.T, b2=b2.reshape(1, NH),
                wpk=wpk, bp=bp.reshape(1, O))


# ------------------------------ forward wrapper ------------------------------
@jax.jit
def eeap_forward(params, text_batch, text_lengths):
    B, T = text_batch.shape
    assert (B, T) == (BATCH, MAX_LEN)
    H = ENCODING_HIDDEN_SIZE
    # time-major flattened tokens (row = s*B + b); bwd tokens are time-reversed and
    # pre-offset by +V so the kernel builds a single (T*B, 2V) one-hot.
    tokf = jnp.transpose(text_batch).reshape(T * B, 1).astype(jnp.int32)
    tokb = (jnp.transpose(text_batch[:, ::-1]).reshape(T * B, 1).astype(jnp.int32)
            + VOCAB_SIZE)
    lengths = text_lengths.astype(jnp.int32)                      # (B,)  -> SMEM scalars
    len_v = lengths.reshape(B, 1)                                 # (B,1) -> VMEM vector

    return pl.pallas_call(
        _eeap_fused_kernel,
        out_shape=jax.ShapeDtypeStruct((B, OUTPUT_SIZE), jnp.float32),
        in_specs=[pl.BlockSpec(memory_space=pltpu.MemorySpace.SMEM)] +
                 [pl.BlockSpec(memory_space=pltpu.MemorySpace.VMEM)] * 12,
        out_specs=pl.BlockSpec(memory_space=pltpu.MemorySpace.VMEM),
        scratch_shapes=[pltpu.VMEM((T * B, 8 * H), jnp.float32),   # staged xproj
                        pltpu.VMEM((B * T, 2 * H), jnp.float32)],  # batch-major encoded seq
    )(lengths, len_v, tokf, tokb,
      params["wbig"], params["whh"], params["bias"],
      params["w1"], params["b1"], params["w2"], params["b2"],
      params["wpk"], params["bp"])


# --------------------------------- main -------------------------------------
if __name__ == "__main__":
    key = jax.random.PRNGKey(0)
    pkey, tkey = jax.random.split(key)
    params = init_params(pkey)

    # lengths sorted descending (pack_padded_sequence default); pad with PAD_IDX
    text_lengths = jnp.array([MAX_LEN, 5], dtype=jnp.int32)
    tokens = jax.random.randint(tkey, (BATCH, MAX_LEN), 1, VOCAB_SIZE, jnp.int32)
    pos = jnp.arange(MAX_LEN)[None, :]
    text_batch = jnp.where(pos < text_lengths[:, None], tokens, PAD_IDX)

    pred = eeap_forward(params, text_batch, text_lengths)
    pred = jax.block_until_ready(pred)

    assert pred.shape == (BATCH, OUTPUT_SIZE)
    assert bool(jnp.all(jnp.isfinite(pred)))
    row_sums = jnp.sum(pred, axis=1)
    assert bool(jnp.all(jnp.abs(row_sums - 1.0) < 1e-4))
    print("KERNEL_OK")
</pallas_src>

<mosaic_0001>
module attributes {stable_mosaic.version = 11 : i64} {
  func.func @_eeap_fused_kernel(%arg0: memref<2xi32, #tpu.memory_space<smem>>, %arg1: memref<2x1xi32, #tpu.memory_space<vmem>>, %arg2: memref<16x1xi32, #tpu.memory_space<vmem>>, %arg3: memref<16x1xi32, #tpu.memory_space<vmem>>, %arg4: memref<40x128xf32, #tpu.memory_space<vmem>>, %arg5: memref<32x128xf32, #tpu.memory_space<vmem>>, %arg6: memref<1x128xf32, #tpu.memory_space<vmem>>, %arg7: memref<32x16xf32, #tpu.memory_space<vmem>>, %arg8: memref<1x16xf32, #tpu.memory_space<vmem>>, %arg9: memref<16x2xf32, #tpu.memory_space<vmem>>, %arg10: memref<1x2xf32, #tpu.memory_space<vmem>>, %arg11: memref<64x2xf32, #tpu.memory_space<vmem>>, %arg12: memref<1x2xf32, #tpu.memory_space<vmem>>, %arg13: memref<2x2xf32, #tpu.memory_space<vmem>>, %arg14: memref<16x128xf32, #tpu.memory_space<vmem>>, %arg15: memref<16x32xf32, #tpu.memory_space<vmem>>) attributes {dimension_semantics = [], scalar_prefetch = 0 : i64, scratch_operands = 2 : i64, tpu.core_type = #tpu.core_type<tc>} {
    %0 = tpu.iota {dimensions = array<i32: 1>} : vector<16x40xi32>
    %c0 = arith.constant 0 : index
    %c0_0 = arith.constant 0 : index
    %1 = vector.load %arg2[%c0, %c0_0] : memref<16x1xi32, #tpu.memory_space<vmem>>, vector<16x1xi32>
    %2 = vector.broadcast %1 : vector<16x1xi32> to vector<16x40xi32>
    %3 = arith.cmpi eq, %0, %2 : vector<16x40xi32>
    %c0_1 = arith.constant 0 : index
    %c0_2 = arith.constant 0 : index
    %4 = vector.load %arg3[%c0_1, %c0_2] : memref<16x1xi32, #tpu.memory_space<vmem>>, vector<16x1xi32>
    %5 = vector.broadcast %4 : vector<16x1xi32> to vector<16x40xi32>
    %6 = arith.cmpi eq, %0, %5 : vector<16x40xi32>
    %7 = arith.ori %3, %6 : vector<16x40xi1>
    %8 = arith.extui %7 : vector<16x40xi1> to vector<16x40xi32>
    %9 = arith.sitofp %8 : vector<16x40xi32> to vector<16x40xf32>
    %c0_3 = arith.constant 0 : index
    %c0_4 = arith.constant 0 : index
    %10 = vector.load %arg4[%c0_3, %c0_4] : memref<40x128xf32, #tpu.memory_space<vmem>>, vector<40x128xf32>
    %cst = arith.constant dense<0.000000e+00> : vector<16x128xf32>
    %11 = tpu.matmul %9, %10, %cst {dimension_numbers = #tpu.dot_dimension_numbers<[1], [0], [0], [1], [0, 0, 1, 1], [], []>} : vector<16x40xf32>, vector<40x128xf32>, vector<16x128xf32> -> vector<16x128xf32>
    %c0_5 = arith.constant 0 : index
    %c0_6 = arith.constant 0 : index
    %12 = vector.load %arg6[%c0_5, %c0_6] : memref<1x128xf32, #tpu.memory_space<vmem>>, vector<1x128xf32>
    %13 = vector.broadcast %12 : vector<1x128xf32> to vector<16x128xf32>
    %14 = arith.addf %11, %13 : vector<16x128xf32>
    %c0_7 = arith.constant 0 : index
    %c0_8 = arith.constant 0 : index
    %15 = vector.load %arg14[%c0_7, %c0_8] : memref<16x128xf32, #tpu.memory_space<vmem>>, vector<16x128xf32>
    tpu.vector_store %arg14[%c0_7, %c0_8], %14 {strides = array<i32>} : memref<16x128xf32, #tpu.memory_space<vmem>>, vector<16x128xf32>,
    %c0_9 = arith.constant 0 : index
    %c0_10 = arith.constant 0 : index
    %16 = vector.load %arg5[%c0_9, %c0_10] : memref<32x128xf32, #tpu.memory_space<vmem>>, vector<32x128xf32>
    %c0_11 = arith.constant 0 : index
    %c0_12 = arith.constant 0 : index
    %17 = vector.load %arg1[%c0_11, %c0_12] : memref<2x1xi32, #tpu.memory_space<vmem>>, vector<2x1xi32>
    %18 = tpu.iota {dimensions = array<i32: 1>} : vector<1x32xi32>
    %c16_i32 = arith.constant 16 : i32
    %19 = vector.broadcast %c16_i32 : i32 to vector<1x32xi32>
    %20 = arith.cmpi slt, %18, %19 : vector<1x32xi32>
    %cst_13 = arith.constant 0.000000e+00 : f32
    %21 = vector.broadcast %cst_13 : f32 to vector<2x32xf32>
    %cst_14 = arith.constant 0.000000e+00 : f32
    %22 = vector.broadcast %cst_14 : f32 to vector<2x32xf32>
    %c0_15 = arith.constant 0 : index
    %c0_16 = arith.constant 0 : index
    %23 = vector.load %arg14[%c0_15, %c0_16] : memref<16x128xf32, #tpu.memory_space<vmem>>, vector<2x128xf32>
    %cst_17 = arith.constant dense<0.000000e+00> : vector<2x128xf32>
    %24 = tpu.matmul %21, %16, %cst_17 {dimension_numbers = #tpu.dot_dimension_numbers<[1], [0], [0], [1], [0, 0, 1, 1], [], []>} : vector<2x32xf32>, vector<32x128xf32>, vector<2x128xf32> -> vector<2x128xf32>
    %25 = arith.addf %23, %24 : vector<2x128xf32>
    %26 = arith.negf %25 : vector<2x128xf32>
    %27 = math.exp %26 : vector<2x128xf32>
    %cst_18 = arith.constant 1.000000e+00 : f32
    %28 = vector.broadcast %cst_18 : f32 to vector<2x128xf32>
    %29 = arith.addf %28, %27 : vector<2x128xf32>
    %30 = arith.divf %28, %29 : vector<2x128xf32>
    %31 = vector.extract_strided_slice %30 {offsets = [0, 0], sizes = [2, 32], strides = [1, 1]} : vector<2x128xf32> to vector<2x32xf32>
    %32 = vector.extract_strided_slice %30 {offsets = [0, 32], sizes = [2, 32], strides = [1, 1]} : vector<2x128xf32> to vector<2x32xf32>
    %33 = vector.extract_strided_slice %30 {offsets = [0, 64], sizes = [2, 32], strides = [1, 1]} : vector<2x128xf32> to vector<2x32xf32>
    %cst_19 = arith.constant 2.000000e+00 : f32
    %34 = vector.broadcast %cst_19 : f32 to vector<2x32xf32>
    %35 = arith.mulf %34, %33 : vector<2x32xf32>
    %cst_20 = arith.constant 1.000000e+00 : f32
    %36 = vector.broadcast %cst_20 : f32 to vector<2x32xf32>
    %37 = arith.subf %35, %36 : vector<2x32xf32>
    %38 = vector.extract_strided_slice %30 {offsets = [0, 96], sizes = [2, 32], strides = [1, 1]} : vector<2x128xf32> to vector<2x32xf32>
    %39 = arith.mulf %32, %22 : vector<2x32xf32>
    %40 = arith.mulf %31, %37 : vector<2x32xf32>
    %41 = arith.addf %39, %40 : vector<2x32xf32>
    %42 = math.tanh %41 : vector<2x32xf32>
    %43 = arith.mulf %38, %42 : vector<2x32xf32>
    %c0_i32 = arith.constant 0 : i32
    %c7_i32 = arith.constant 7 : i32
    %44 = vector.broadcast %c0_i32 : i32 to vector<1x32xi32>
    %45 = vector.broadcast %c7_i32 : i32 to vector<1x32xi32>
    %46 = arith.select %20, %44, %45 : vector<1x32xi1>, vector<1x32xi32>
    %47 = vector.broadcast %46 : vector<1x32xi32> to vector<2x32xi32>
    %48 = vector.broadcast %17 : vector<2x1xi32> to vector<2x32xi32>
    %49 = arith.cmpi slt, %47, %48 : vector<2x32xi32>
    %50 = arith.select %49, %41, %22 : vector<2x32xi1>, vector<2x32xf32>
    %51 = arith.select %49, %43, %21 : vector<2x32xi1>, vector<2x32xf32>
    %cst_21 = arith.constant 0.000000e+00 : f32
    %52 = vector.broadcast %cst_21 : f32 to vector<2x32xf32>
    %53 = arith.select %49, %43, %52 : vector<2x32xi1>, vector<2x32xf32>
    %54 = vector.extract_strided_slice %53 {offsets = [0, 0], sizes = [1, 16], strides = [1, 1]} : vector<2x32xf32> to vector<1x16xf32>
    %c0_22 = arith.constant 0 : index
    %c0_23 = arith.constant 0 : index
    %55 = vector.load %arg15[%c0_22, %c0_23] : memref<16x32xf32, #tpu.memory_space<vmem>>, vector<1x16xf32>
    tpu.vector_store %arg15[%c0_22, %c0_23], %54 {strides = array<i32>} : memref<16x32xf32, #tpu.memory_space<vmem>>, vector<1x16xf32>,
    %56 = vector.extract_strided_slice %53 {offsets = [0, 16], sizes = [1, 16], strides = [1, 1]} : vector<2x32xf32> to vector<1x16xf32>
    %c7 = arith.constant 7 : index
    %c16 = arith.constant 16 : index
    %57 = vector.load %arg15[%c7, %c16] : memref<16x32xf32, #tpu.memory_space<vmem>>, vector<1x16xf32>
    tpu.vector_store %arg15[%c7, %c16], %56 {strides = array<i32>} : memref<16x32xf32, #tpu.memory_space<vmem>>, vector<1x16xf32>,
    %58 = vector.extract_strided_slice %53 {offsets = [1, 0], sizes = [1, 16], strides = [1, 1]} : vector<2x32xf32> to vector<1x16xf32>
    %c8 = arith.constant 8 : index
    %c0_24 = arith.constant 0 : index
    %59 = vector.load %arg15[%c8, %c0_24] : memref<16x32xf32, #tpu.memory_space<vmem>>, vector<1x16xf32>
    tpu.vector_store %arg15[%c8, %c0_24], %58 {strides = array<i32>} : memref<16x32xf32, #tpu.memory_space<vmem>>, vector<1x16xf32>,
    %60 = vector.extract_strided_slice %53 {offsets = [1, 16], sizes = [1, 16], strides = [1, 1]} : vector<2x32xf32> to vector<1x16xf32>
    %c15 = arith.constant 15 : index
    %c16_25 = arith.constant 16 : index
    %61 = vector.load %arg15[%c15, %c16_25] : memref<16x32xf32, #tpu.memory_space<vmem>>, vector<1x16xf32>
    tpu.vector_store %arg15[%c15, %c16_25], %60 {strides = array<i32>} : memref<16x32xf32, #tpu.memory_space<vmem>>, vector<1x16xf32>,
    %c2 = arith.constant 2 : index
    %c0_26 = arith.constant 0 : index
    %62 = vector.load %arg14[%c2, %c0_26] : memref<16x128xf32, #tpu.memory_space<vmem>>, vector<2x128xf32>
    %cst_27 = arith.constant dense<0.000000e+00> : vector<2x128xf32>
    %63 = tpu.matmul %51, %16, %cst_27 {dimension_numbers = #tpu.dot_dimension_numbers<[1], [0], [0], [1], [0, 0, 1, 1], [], []>} : vector<2x32xf32>, vector<32x128xf32>, vector<2x128xf32> -> vector<2x128xf32>
    %64 = arith.addf %62, %63 : vector<2x128xf32>
    %65 = arith.negf %64 : vector<2x128xf32>
    %66 = math.exp %65 : vector<2x128xf32>
    %cst_28 = arith.constant 1.000000e+00 : f32
    %67 = vector.broadcast %cst_28 : f32 to vector<2x128xf32>
    %68 = arith.addf %67, %66 : vector<2x128xf32>
    %69 = arith.divf %67, %68 : vector<2x128xf32>
    %70 = vector.extract_strided_slice %69 {offsets = [0, 0], sizes = [2, 32], strides = [1, 1]} : vector<2x128xf32> to vector<2x32xf32>
    %71 = vector.extract_strided_slice %69 {offsets = [0, 32], sizes = [2, 32], strides = [1, 1]} : vector<2x128xf32> to vector<2x32xf32>
    %72 = vector.extract_strided_slice %69 {offsets = [0, 64], sizes = [2, 32], strides = [1, 1]} : vector<2x128xf32> to vector<2x32xf32>
    %cst_29 = arith.constant 2.000000e+00 : f32
    %73 = vector.broadcast %cst_29 : f32 to vector<2x32xf32>
    %74 = arith.mulf %73, %72 : vector<2x32xf32>
    %cst_30 = arith.constant 1.000000e+00 : f32
    %75 = vector.broadcast %cst_30 : f32 to vector<2x32xf32>
    %76 = arith.subf %74, %75 : vector<2x32xf32>
    %77 = vector.extract_strided_slice %69 {offsets = [0, 96], sizes = [2, 32], strides = [1, 1]} : vector<2x128xf32> to vector<2x32xf32>
    %78 = arith.mulf %71, %50 : vector<2x32xf32>
    %79 = arith.mulf %70, %76 : vector<2x32xf32>
    %80 = arith.addf %78, %79 : vector<2x32xf32>
    %81 = math.tanh %80 : vector<2x32xf32>
    %82 = arith.mulf %77, %81 : vector<2x32xf32>
    %c1_i32 = arith.constant 1 : i32
    %c6_i32 = arith.constant 6 : i32
    %83 = vector.broadcast %c1_i32 : i32 to vector<1x32xi32>
    %84 = vector.broadcast %c6_i32 : i32 to vector<1x32xi32>
    %85 = arith.select %20, %83, %84 : vector<1x32xi1>, vector<1x32xi32>
    %86 = vector.broadcast %85 : vector<1x32xi32> to vector<2x32xi32>
    %87 = vector.broadcast %17 : vector<2x1xi32> to vector<2x32xi32>
    %88 = arith.cmpi slt, %86, %87 : vector<2x32xi32>
    %89 = arith.select %88, %80, %50 : vector<2x32xi1>, vector<2x32xf32>
    %90 = arith.select %88, %82, %51 : vector<2x32xi1>, vector<2x32xf32>
    %cst_31 = arith.constant 0.000000e+00 : f32
    %91 = vector.broadcast %cst_31 : f32 to vector<2x32xf32>
    %92 = arith.select %88, %82, %91 : vector<2x32xi1>, vector<2x32xf32>
    %93 = vector.extract_strided_slice %92 {offsets = [0, 0], sizes = [1, 16], strides = [1, 1]} : vector<2x32xf32> to vector<1x16xf32>
    %c1 = arith.constant 1 : index
    %c0_32 = arith.constant 0 : index
    %94 = vector.load %arg15[%c1, %c0_32] : memref<16x32xf32, #tpu.memory_space<vmem>>, vector<1x16xf32>
    tpu.vector_store %arg15[%c1, %c0_32], %93 {strides = array<i32>} : memref<16x32xf32, #tpu.memory_space<vmem>>, vector<1x16xf32>,
    %95 = vector.extract_strided_slice %92 {offsets = [0, 16], sizes = [1, 16], strides = [1, 1]} : vector<2x32xf32> to vector<1x16xf32>
    %c6 = arith.constant 6 : index
    %c16_33 = arith.constant 16 : index
    %96 = vector.load %arg15[%c6, %c16_33] : memref<16x32xf32, #tpu.memory_space<vmem>>, vector<1x16xf32>
    tpu.vector_store %arg15[%c6, %c16_33], %95 {strides = array<i32>} : memref<16x32xf32, #tpu.memory_space<vmem>>, vector<1x16xf32>,
    %97 = vector.extract_strided_slice %92 {offsets = [1, 0], sizes = [1, 16], strides = [1, 1]} : vector<2x32xf32> to vector<1x16xf32>
    %c9 = arith.constant 9 : index
    %c0_34 = arith.constant 0 : index
    %98 = vector.load %arg15[%c9, %c0_34] : memref<16x32xf32, #tpu.memory_space<vmem>>, vector<1x16xf32>
    tpu.vector_store %arg15[%c9, %c0_34], %97 {strides = array<i32>} : memref<16x32xf32, #tpu.memory_space<vmem>>, vector<1x16xf32>,
    %99 = vector.extract_strided_slice %92 {offsets = [1, 16], sizes = [1, 16], strides = [1, 1]} : vector<2x32xf32> to vector<1x16xf32>
    %c14 = arith.constant 14 : index
    %c16_35 = arith.constant 16 : index
    %100 = vector.load %arg15[%c14, %c16_35] : memref<16x32xf32, #tpu.memory_space<vmem>>, vector<1x16xf32>
    tpu.vector_store %arg15[%c14, %c16_35], %99 {strides = array<i32>} : memref<16x32xf32, #tpu.memory_space<vmem>>, vector<1x16xf32>,
    %c4 = arith.constant 4 : index
    %c0_36 = arith.constant 0 : index
    %101 = vector.load %arg14[%c4, %c0_36] : memref<16x128xf32, #tpu.memory_space<vmem>>, vector<2x128xf32>
    %cst_37 = arith.constant dense<0.000000e+00> : vector<2x128xf32>
    %102 = tpu.matmul %90, %16, %cst_37 {dimension_numbers = #tpu.dot_dimension_numbers<[1], [0], [0], [1], [0, 0, 1, 1], [], []>} : vector<2x32xf32>, vector<32x128xf32>, vector<2x128xf32> -> vector<2x128xf32>
    %103 = arith.addf %101, %102 : vector<2x128xf32>
    %104 = arith.negf %103 : vector<2x128xf32>
    %105 = math.exp %104 : vector<2x128xf32>
    %cst_38 = arith.constant 1.000000e+00 : f32
    %106 = vector.broadcast %cst_38 : f32 to vector<2x128xf32>
    %107 = arith.addf %106, %105 : vector<2x128xf32>
    %108 = arith.divf %106, %107 : vector<2x128xf32>
    %109 = vector.extract_strided_slice %108 {offsets = [0, 0], sizes = [2, 32], strides = [1, 1]} : vector<2x128xf32> to vector<2x32xf32>
    %110 = vector.extract_strided_slice %108 {offsets = [0, 32], sizes = [2, 32], strides = [1, 1]} : vector<2x128xf32> to vector<2x32xf32>
    %111 = vector.extract_strided_slice %108 {offsets = [0, 64], sizes = [2, 32], strides = [1, 1]} : vector<2x128xf32> to vector<2x32xf32>
    %cst_39 = arith.constant 2.000000e+00 : f32
    %112 = vector.broadcast %cst_39 : f32 to vector<2x32xf32>
    %113 = arith.mulf %112, %111 : vector<2x32xf32>
    %cst_40 = arith.constant 1.000000e+00 : f32
    %114 = vector.broadcast %cst_40 : f32 to vector<2x32xf32>
    %115 = arith.subf %113, %114 : vector<2x32xf32>
    %116 = vector.extract_strided_slice %108 {offsets = [0, 96], sizes = [2, 32], strides = [1, 1]} : vector<2x128xf32> to vector<2x32xf32>
    %117 = arith.mulf %110, %89 : vector<2x32xf32>
    %118 = arith.mulf %109, %115 : vector<2x32xf32>
    %119 = arith.addf %117, %118 : vector<2x32xf32>
    %120 = math.tanh %119 : vector<2x32xf32>
    %121 = arith.mulf %116, %120 : vector<2x32xf32>
    %c2_i32 = arith.constant 2 : i32
    %c5_i32 = arith.constant 5 : i32
    %122 = vector.broadcast %c2_i32 : i32 to vector<1x32xi32>
    %123 = vector.broadcast %c5_i32 : i32 to vector<1x32xi32>
    %124 = arith.select %20, %122, %123 : vector<1x32xi1>, vector<1x32xi32>
    %125 = vector.broadcast %124 : vector<1x32xi32> to vector<2x32xi32>
    %126 = vector.broadcast %17 : vector<2x1xi32> to vector<2x32xi32>
    %127 = arith.cmpi slt, %125, %126 : vector<2x32xi32>
    %128 = arith.select %127, %119, %89 : vector<2x32xi1>, vector<2x32xf32>
    %129 = arith.select %127, %121, %90 : vector<2x32xi1>, vector<2x32xf32>
    %cst_41 = arith.constant 0.000000e+00 : f32
    %130 = vector.broadcast %cst_41 : f32 to vector<2x32xf32>
    %131 = arith.select %127, %121, %130 : vector<2x32xi1>, vector<2x32xf32>
    %132 = vector.extract_strided_slice %131 {offsets = [0, 0], sizes = [1, 16], strides = [1, 1]} : vector<2x32xf32> to vector<1x16xf32>
    %c2_42 = arith.constant 2 : index
    %c0_43 = arith.constant 0 : index
    %133 = vector.load %arg15[%c2_42, %c0_43] : memref<16x32xf32, #tpu.memory_space<vmem>>, vector<1x16xf32>
    tpu.vector_store %arg15[%c2_42, %c0_43], %132 {strides = array<i32>} : memref<16x32xf32, #tpu.memory_space<vmem>>, vector<1x16xf32>,
    %134 = vector.extract_strided_slice %131 {offsets = [0, 16], sizes = [1, 16], strides = [1, 1]} : vector<2x32xf32> to vector<1x16xf32>
    %c5 = arith.constant 5 : index
    %c16_44 = arith.constant 16 : index
    %135 = vector.load %arg15[%c5, %c16_44] : memref<16x32xf32, #tpu.memory_space<vmem>>, vector<1x16xf32>
    tpu.vector_store %arg15[%c5, %c16_44], %134 {strides = array<i32>} : memref<16x32xf32, #tpu.memory_space<vmem>>, vector<1x16xf32>,
    %136 = vector.extract_strided_slice %131 {offsets = [1, 0], sizes = [1, 16], strides = [1, 1]} : vector<2x32xf32> to vector<1x16xf32>
    %c10 = arith.constant 10 : index
    %c0_45 = arith.constant 0 : index
    %137 = vector.load %arg15[%c10, %c0_45] : memref<16x32xf32, #tpu.memory_space<vmem>>, vector<1x16xf32>
    tpu.vector_store %arg15[%c10, %c0_45], %136 {strides = array<i32>} : memref<16x32xf32, #tpu.memory_space<vmem>>, vector<1x16xf32>,
    %138 = vector.extract_strided_slice %131 {offsets = [1, 16], sizes = [1, 16], strides = [1, 1]} : vector<2x32xf32> to vector<1x16xf32>
    %c13 = arith.constant 13 : index
    %c16_46 = arith.constant 16 : index
    %139 = vector.load %arg15[%c13, %c16_46] : memref<16x32xf32, #tpu.memory_space<vmem>>, vector<1x16xf32>
    tpu.vector_store %arg15[%c13, %c16_46], %138 {strides = array<i32>} : memref<16x32xf32, #tpu.memory_space<vmem>>, vector<1x16xf32>,
    %c6_47 = arith.constant 6 : index
    %c0_48 = arith.constant 0 : index
    %140 = vector.load %arg14[%c6_47, %c0_48] : memref<16x128xf32, #tpu.memory_space<vmem>>, vector<2x128xf32>
    %cst_49 = arith.constant dense<0.000000e+00> : vector<2x128xf32>
    %141 = tpu.matmul %129, %16, %cst_49 {dimension_numbers = #tpu.dot_dimension_numbers<[1], [0], [0], [1], [0, 0, 1, 1], [], []>} : vector<2x32xf32>, vector<32x128xf32>, vector<2x128xf32> -> vector<2x128xf32>
    %142 = arith.addf %140, %141 : vector<2x128xf32>
    %143 = arith.negf %142 : vector<2x128xf32>
    %144 = math.exp %143 : vector<2x128xf32>
    %cst_50 = arith.constant 1.000000e+00 : f32
    %145 = vector.broadcast %cst_50 : f32 to vector<2x128xf32>
    %146 = arith.addf %145, %144 : vector<2x128xf32>
    %147 = arith.divf %145, %146 : vector<2x128xf32>
    %148 = vector.extract_strided_slice %147 {offsets = [0, 0], sizes = [2, 32], strides = [1, 1]} : vector<2x128xf32> to vector<2x32xf32>
    %149 = vector.extract_strided_slice %147 {offsets = [0, 32], sizes = [2, 32], strides = [1, 1]} : vector<2x128xf32> to vector<2x32xf32>
    %150 = vector.extract_strided_slice %147 {offsets = [0, 64], sizes = [2, 32], strides = [1, 1]} : vector<2x128xf32> to vector<2x32xf32>
    %cst_51 = arith.constant 2.000000e+00 : f32
    %151 = vector.broadcast %cst_51 : f32 to vector<2x32xf32>
    %152 = arith.mulf %151, %150 : vector<2x32xf32>
    %cst_52 = arith.constant 1.000000e+00 : f32
    %153 = vector.broadcast %cst_52 : f32 to vector<2x32xf32>
    %154 = arith.subf %152, %153 : vector<2x32xf32>
    %155 = vector.extract_strided_slice %147 {offsets = [0, 96], sizes = [2, 32], strides = [1, 1]} : vector<2x128xf32> to vector<2x32xf32>
    %156 = arith.mulf %149, %128 : vector<2x32xf32>
    %157 = arith.mulf %148, %154 : vector<2x32xf32>
    %158 = arith.addf %156, %157 : vector<2x32xf32>
    %159 = math.tanh %158 : vector<2x32xf32>
    %160 = arith.mulf %155, %159 : vector<2x32xf32>
    %c3_i32 = arith.constant 3 : i32
    %c4_i32 = arith.constant 4 : i32
    %161 = vector.broadcast %c3_i32 : i32 to vector<1x32xi32>
    %162 = vector.broadcast %c4_i32 : i32 to vector<1x32xi32>
    %163 = arith.select %20, %161, %162 : vector<1x32xi1>, vector<1x32xi32>
    %164 = vector.broadcast %163 : vector<1x32xi32> to vector<2x32xi32>
    %165 = vector.broadcast %17 : vector<2x1xi32> to vector<2x32xi32>
    %166 = arith.cmpi slt, %164, %165 : vector<2x32xi32>
    %167 = arith.select %166, %158, %128 : vector<2x32xi1>, vector<2x32xf32>
    %168 = arith.select %166, %160, %129 : vector<2x32xi1>, vector<2x32xf32>
    %cst_53 = arith.constant 0.000000e+00 : f32
    %169 = vector.broadcast %cst_53 : f32 to vector<2x32xf32>
    %170 = arith.select %166, %160, %169 : vector<2x32xi1>, vector<2x32xf32>
    %171 = vector.extract_strided_slice %170 {offsets = [0, 0], sizes = [1, 16], strides = [1, 1]} : vector<2x32xf32> to vector<1x16xf32>
    %c3 = arith.constant 3 : index
    %c0_54 = arith.constant 0 : index
    %172 = vector.load %arg15[%c3, %c0_54] : memref<16x32xf32, #tpu.memory_space<vmem>>, vector<1x16xf32>
    tpu.vector_store %arg15[%c3, %c0_54], %171 {strides = array<i32>} : memref<16x32xf32, #tpu.memory_space<vmem>>, vector<1x16xf32>,
    %173 = vector.extract_strided_slice %170 {offsets = [0, 16], sizes = [1, 16], strides = [1, 1]} : vector<2x32xf32> to vector<1x16xf32>
    %c4_55 = arith.constant 4 : index
    %c16_56 = arith.constant 16 : index
    %174 = vector.load %arg15[%c4_55, %c16_56] : memref<16x32xf32, #tpu.memory_space<vmem>>, vector<1x16xf32>
    tpu.vector_store %arg15[%c4_55, %c16_56], %173 {strides = array<i32>} : memref<16x32xf32, #tpu.memory_space<vmem>>, vector<1x16xf32>,
    %175 = vector.extract_strided_slice %170 {offsets = [1, 0], sizes = [1, 16], strides = [1, 1]} : vector<2x32xf32> to vector<1x16xf32>
    %c11 = arith.constant 11 : index
    %c0_57 = arith.constant 0 : index
    %176 = vector.load %arg15[%c11, %c0_57] : memref<16x32xf32, #tpu.memory_space<vmem>>, vector<1x16xf32>
    tpu.vector_store %arg15[%c11, %c0_57], %175 {strides = array<i32>} : memref<16x32xf32, #tpu.memory_space<vmem>>, vector<1x16xf32>,
    %177 = vector.extract_strided_slice %170 {offsets = [1, 16], sizes = [1, 16], strides = [1, 1]} : vector<2x32xf32> to vector<1x16xf32>
    %c12 = arith.constant 12 : index
    %c16_58 = arith.constant 16 : index
    %178 = vector.load %arg15[%c12, %c16_58] : memref<16x32xf32, #tpu.memory_space<vmem>>, vector<1x16xf32>
    tpu.vector_store %arg15[%c12, %c16_58], %177 {strides = array<i32>} : memref<16x32xf32, #tpu.memory_space<vmem>>, vector<1x16xf32>,
    %c8_59 = arith.constant 8 : index
    %c0_60 = arith.constant 0 : index
    %179 = vector.load %arg14[%c8_59, %c0_60] : memref<16x128xf32, #tpu.memory_space<vmem>>, vector<2x128xf32>
    %cst_61 = arith.constant dense<0.000000e+00> : vector<2x128xf32>
    %180 = tpu.matmul %168, %16, %cst_61 {dimension_numbers = #tpu.dot_dimension_numbers<[1], [0], [0], [1], [0, 0, 1, 1], [], []>} : vector<2x32xf32>, vector<32x128xf32>, vector<2x128xf32> -> vector<2x128xf32>
    %181 = arith.addf %179, %180 : vector<2x128xf32>
    %182 = arith.negf %181 : vector<2x128xf32>
    %183 = math.exp %182 : vector<2x128xf32>
    %cst_62 = arith.constant 1.000000e+00 : f32
    %184 = vector.broadcast %cst_62 : f32 to vector<2x128xf32>
    %185 = arith.addf %184, %183 : vector<2x128xf32>
    %186 = arith.divf %184, %185 : vector<2x128xf32>
    %187 = vector.extract_strided_slice %186 {offsets = [0, 0], sizes = [2, 32], strides = [1, 1]} : vector<2x128xf32> to vector<2x32xf32>
    %188 = vector.extract_strided_slice %186 {offsets = [0, 32], sizes = [2, 32], strides = [1, 1]} : vector<2x128xf32> to vector<2x32xf32>
    %189 = vector.extract_strided_slice %186 {offsets = [0, 64], sizes = [2, 32], strides = [1, 1]} : vector<2x128xf32> to vector<2x32xf32>
    %cst_63 = arith.constant 2.000000e+00 : f32
    %190 = vector.broadcast %cst_63 : f32 to vector<2x32xf32>
    %191 = arith.mulf %190, %189 : vector<2x32xf32>
    %cst_64 = arith.constant 1.000000e+00 : f32
    %192 = vector.broadcast %cst_64 : f32 to vector<2x32xf32>
    %193 = arith.subf %191, %192 : vector<2x32xf32>
    %194 = vector.extract_strided_slice %186 {offsets = [0, 96], sizes = [2, 32], strides = [1, 1]} : vector<2x128xf32> to vector<2x32xf32>
    %195 = arith.mulf %188, %167 : vector<2x32xf32>
    %196 = arith.mulf %187, %193 : vector<2x32xf32>
    %197 = arith.addf %195, %196 : vector<2x32xf32>
    %198 = math.tanh %197 : vector<2x32xf32>
    %199 = arith.mulf %194, %198 : vector<2x32xf32>
    %c4_i32_65 = arith.constant 4 : i32
    %c3_i32_66 = arith.constant 3 : i32
    %200 = vector.broadcast %c4_i32_65 : i32 to vector<1x32xi32>
    %201 = vector.broadcast %c3_i32_66 : i32 to vector<1x32xi32>
    %202 = arith.select %20, %200, %201 : vector<1x32xi1>, vector<1x32xi32>
    %203 = vector.broadcast %202 : vector<1x32xi32> to vector<2x32xi32>
    %204 = vector.broadcast %17 : vector<2x1xi32> to vector<2x32xi32>
    %205 = arith.cmpi slt, %203, %204 : vector<2x32xi32>
    %206 = arith.select %205, %197, %167 : vector<2x32xi1>, vector<2x32xf32>
    %207 = arith.select %205, %199, %168 : vector<2x32xi1>, vector<2x32xf32>
    %cst_67 = arith.constant 0.000000e+00 : f32
    %208 = vector.broadcast %cst_67 : f32 to vector<2x32xf32>
    %209 = arith.select %205, %199, %208 : vector<2x32xi1>, vector<2x32xf32>
    %210 = vector.extract_strided_slice %209 {offsets = [0, 0], sizes = [1, 16], strides = [1, 1]} : vector<2x32xf32> to vector<1x16xf32>
    %c4_68 = arith.constant 4 : index
    %c0_69 = arith.constant 0 : index
    %211 = vector.load %arg15[%c4_68, %c0_69] : memref<16x32xf32, #tpu.memory_space<vmem>>, vector<1x16xf32>
    tpu.vector_store %arg15[%c4_68, %c0_69], %210 {strides = array<i32>} : memref<16x32xf32, #tpu.memory_space<vmem>>, vector<1x16xf32>,
    %212 = vector.extract_strided_slice %209 {offsets = [0, 16], sizes = [1, 16], strides = [1, 1]} : vector<2x32xf32> to vector<1x16xf32>
    %c3_70 = arith.constant 3 : index
    %c16_71 = arith.constant 16 : index
    %213 = vector.load %arg15[%c3_70, %c16_71] : memref<16x32xf32, #tpu.memory_space<vmem>>, vector<1x16xf32>
    tpu.vector_store %arg15[%c3_70, %c16_71], %212 {strides = array<i32>} : memref<16x32xf32, #tpu.memory_space<vmem>>, vector<1x16xf32>,
    %214 = vector.extract_strided_slice %209 {offsets = [1, 0], sizes = [1, 16], strides = [1, 1]} : vector<2x32xf32> to vector<1x16xf32>
    %c12_72 = arith.constant 12 : index
    %c0_73 = arith.constant 0 : index
    %215 = vector.load %arg15[%c12_72, %c0_73] : memref<16x32xf32, #tpu.memory_space<vmem>>, vector<1x16xf32>
    tpu.vector_store %arg15[%c12_72, %c0_73], %214 {strides = array<i32>} : memref<16x32xf32, #tpu.memory_space<vmem>>, vector<1x16xf32>,
    %216 = vector.extract_strided_slice %209 {offsets = [1, 16], sizes = [1, 16], strides = [1, 1]} : vector<2x32xf32> to vector<1x16xf32>
    %c11_74 = arith.constant 11 : index
    %c16_75 = arith.constant 16 : index
    %217 = vector.load %arg15[%c11_74, %c16_75] : memref<16x32xf32, #tpu.memory_space<vmem>>, vector<1x16xf32>
    tpu.vector_store %arg15[%c11_74, %c16_75], %216 {strides = array<i32>} : memref<16x32xf32, #tpu.memory_space<vmem>>, vector<1x16xf32>,
    %c10_76 = arith.constant 10 : index
    %c0_77 = arith.constant 0 : index
    %218 = vector.load %arg14[%c10_76, %c0_77] : memref<16x128xf32, #tpu.memory_space<vmem>>, vector<2x128xf32>
    %cst_78 = arith.constant dense<0.000000e+00> : vector<2x128xf32>
    %219 = tpu.matmul %207, %16, %cst_78 {dimension_numbers = #tpu.dot_dimension_numbers<[1], [0], [0], [1], [0, 0, 1, 1], [], []>} : vector<2x32xf32>, vector<32x128xf32>, vector<2x128xf32> -> vector<2x128xf32>
    %220 = arith.addf %218, %219 : vector<2x128xf32>
    %221 = arith.negf %220 : vector<2x128xf32>
    %222 = math.exp %221 : vector<2x128xf32>
    %cst_79 = arith.constant 1.000000e+00 : f32
    %223 = vector.broadcast %cst_79 : f32 to vector<2x128xf32>
    %224 = arith.addf %223, %222 : vector<2x128xf32>
    %225 = arith.divf %223, %224 : vector<2x128xf32>
    %226 = vector.extract_strided_slice %225 {offsets = [0, 0], sizes = [2, 32], strides = [1, 1]} : vector<2x128xf32> to vector<2x32xf32>
    %227 = vector.extract_strided_slice %225 {offsets = [0, 32], sizes = [2, 32], strides = [1, 1]} : vector<2x128xf32> to vector<2x32xf32>
    %228 = vector.extract_strided_slice %225 {offsets = [0, 64], sizes = [2, 32], strides = [1, 1]} : vector<2x128xf32> to vector<2x32xf32>
    %cst_80 = arith.constant 2.000000e+00 : f32
    %229 = vector.broadcast %cst_80 : f32 to vector<2x32xf32>
    %230 = arith.mulf %229, %228 : vector<2x32xf32>
    %cst_81 = arith.constant 1.000000e+00 : f32
    %231 = vector.broadcast %cst_81 : f32 to vector<2x32xf32>
    %232 = arith.subf %230, %231 : vector<2x32xf32>
    %233 = vector.extract_strided_slice %225 {offsets = [0, 96], sizes = [2, 32], strides = [1, 1]} : vector<2x128xf32> to vector<2x32xf32>
    %234 = arith.mulf %227, %206 : vector<2x32xf32>
    %235 = arith.mulf %226, %232 : vector<2x32xf32>
    %236 = arith.addf %234, %235 : vector<2x32xf32>
    %237 = math.tanh %236 : vector<2x32xf32>
    %238 = arith.mulf %233, %237 : vector<2x32xf32>
    %c5_i32_82 = arith.constant 5 : i32
    %c2_i32_83 = arith.constant 2 : i32
    %239 = vector.broadcast %c5_i32_82 : i32 to vector<1x32xi32>
    %240 = vector.broadcast %c2_i32_83 : i32 to vector<1x32xi32>
    %241 = arith.select %20, %239, %240 : vector<1x32xi1>, vector<1x32xi32>
    %242 = vector.broadcast %241 : vector<1x32xi32> to vector<2x32xi32>
    %243 = vector.broadcast %17 : vector<2x1xi32> to vector<2x32xi32>
    %244 = arith.cmpi slt, %242, %243 : vector<2x32xi32>
    %245 = arith.select %244, %236, %206 : vector<2x32xi1>, vector<2x32xf32>
    %246 = arith.select %244, %238, %207 : vector<2x32xi1>, vector<2x32xf32>
    %cst_84 = arith.constant 0.000000e+00 : f32
    %247 = vector.broadcast %cst_84 : f32 to vector<2x32xf32>
    %248 = arith.select %244, %238, %247 : vector<2x32xi1>, vector<2x32xf32>
    %249 = vector.extract_strided_slice %248 {offsets = [0, 0], sizes = [1, 16], strides = [1, 1]} : vector<2x32xf32> to vector<1x16xf32>
    %c5_85 = arith.constant 5 : index
    %c0_86 = arith.constant 0 : index
    %250 = vector.load %arg15[%c5_85, %c0_86] : memref<16x32xf32, #tpu.memory_space<vmem>>, vector<1x16xf32>
    tpu.vector_store %arg15[%c5_85, %c0_86], %249 {strides = array<i32>} : memref<16x32xf32, #tpu.memory_space<vmem>>, vector<1x16xf32>,
    %251 = vector.extract_strided_slice %248 {offsets = [0, 16], sizes = [1, 16], strides = [1, 1]} : vector<2x32xf32> to vector<1x16xf32>
    %c2_87 = arith.constant 2 : index
    %c16_88 = arith.constant 16 : index
    %252 = vector.load %arg15[%c2_87, %c16_88] : memref<16x32xf32, #tpu.memory_space<vmem>>, vector<1x16xf32>
    tpu.vector_store %arg15[%c2_87, %c16_88], %251 {strides = array<i32>} : memref<16x32xf32, #tpu.memory_space<vmem>>, vector<1x16xf32>,
    %253 = vector.extract_strided_slice %248 {offsets = [1, 0], sizes = [1, 16], strides = [1, 1]} : vector<2x32xf32> to vector<1x16xf32>
    %c13_89 = arith.constant 13 : index
    %c0_90 = arith.constant 0 : index
    %254 = vector.load %arg15[%c13_89, %c0_90] : memref<16x32xf32, #tpu.memory_space<vmem>>, vector<1x16xf32>
    tpu.vector_store %arg15[%c13_89, %c0_90], %253 {strides = array<i32>} : memref<16x32xf32, #tpu.memory_space<vmem>>, vector<1x16xf32>,
    %255 = vector.extract_strided_slice %248 {offsets = [1, 16], sizes = [1, 16], strides = [1, 1]} : vector<2x32xf32> to vector<1x16xf32>
    %c10_91 = arith.constant 10 : index
    %c16_92 = arith.constant 16 : index
    %256 = vector.load %arg15[%c10_91, %c16_92] : memref<16x32xf32, #tpu.memory_space<vmem>>, vector<1x16xf32>
    tpu.vector_store %arg15[%c10_91, %c16_92], %255 {strides = array<i32>} : memref<16x32xf32, #tpu.memory_space<vmem>>, vector<1x16xf32>,
    %c12_93 = arith.constant 12 : index
    %c0_94 = arith.constant 0 : index
    %257 = vector.load %arg14[%c12_93, %c0_94] : memref<16x128xf32, #tpu.memory_space<vmem>>, vector<2x128xf32>
    %cst_95 = arith.constant dense<0.000000e+00> : vector<2x128xf32>
    %258 = tpu.matmul %246, %16, %cst_95 {dimension_numbers = #tpu.dot_dimension_numbers<[1], [0], [0], [1], [0, 0, 1, 1], [], []>} : vector<2x32xf32>, vector<32x128xf32>, vector<2x128xf32> -> vector<2x128xf32>
    %259 = arith.addf %257, %258 : vector<2x128xf32>
    %260 = arith.negf %259 : vector<2x128xf32>
    %261 = math.exp %260 : vector<2x128xf32>
    %cst_96 = arith.constant 1.000000e+00 : f32
    %262 = vector.broadcast %cst_96 : f32 to vector<2x128xf32>
    %263 = arith.addf %262, %261 : vector<2x128xf32>
    %264 = arith.divf %262, %263 : vector<2x128xf32>
    %265 = vector.extract_strided_slice %264 {offsets = [0, 0], sizes = [2, 32], strides = [1, 1]} : vector<2x128xf32> to vector<2x32xf32>
    %266 = vector.extract_strided_slice %264 {offsets = [0, 32], sizes = [2, 32], strides = [1, 1]} : vector<2x128xf32> to vector<2x32xf32>
    %267 = vector.extract_strided_slice %264 {offsets = [0, 64], sizes = [2, 32], strides = [1, 1]} : vector<2x128xf32> to vector<2x32xf32>
    %cst_97 = arith.constant 2.000000e+00 : f32
    %268 = vector.broadcast %cst_97 : f32 to vector<2x32xf32>
    %269 = arith.mulf %268, %267 : vector<2x32xf32>
    %cst_98 = arith.constant 1.000000e+00 : f32
    %270 = vector.broadcast %cst_98 : f32 to vector<2x32xf32>
    %271 = arith.subf %269, %270 : vector<2x32xf32>
    %272 = vector.extract_strided_slice %264 {offsets = [0, 96], sizes = [2, 32], strides = [1, 1]} : vector<2x128xf32> to vector<2x32xf32>
    %273 = arith.mulf %266, %245 : vector<2x32xf32>
    %274 = arith.mulf %265, %271 : vector<2x32xf32>
    %275 = arith.addf %273, %274 : vector<2x32xf32>
    %276 = math.tanh %275 : vector<2x32xf32>
    %277 = arith.mulf %272, %276 : vector<2x32xf32>
    %c6_i32_99 = arith.constant 6 : i32
    %c1_i32_100 = arith.constant 1 : i32
    %278 = vector.broadcast %c6_i32_99 : i32 to vector<1x32xi32>
    %279 = vector.broadcast %c1_i32_100 : i32 to vector<1x32xi32>
    %280 = arith.select %20, %278, %279 : vector<1x32xi1>, vector<1x32xi32>
    %281 = vector.broadcast %280 : vector<1x32xi32> to vector<2x32xi32>
    %282 = vector.broadcast %17 : vector<2x1xi32> to vector<2x32xi32>
    %283 = arith.cmpi slt, %281, %282 : vector<2x32xi32>
    %284 = arith.select %283, %275, %245 : vector<2x32xi1>, vector<2x32xf32>
    %285 = arith.select %283, %277, %246 : vector<2x32xi1>, vector<2x32xf32>
    %cst_101 = arith.constant 0.000000e+00 : f32
    %286 = vector.broadcast %cst_101 : f32 to vector<2x32xf32>
    %287 = arith.select %283, %277, %286 : vector<2x32xi1>, vector<2x32xf32>
    %288 = vector.extract_strided_slice %287 {offsets = [0, 0], sizes = [1, 16], strides = [1, 1]} : vector<2x32xf32> to vector<1x16xf32>
    %c6_102 = arith.constant 6 : index
    %c0_103 = arith.constant 0 : index
    %289 = vector.load %arg15[%c6_102, %c0_103] : memref<16x32xf32, #tpu.memory_space<vmem>>, vector<1x16xf32>
    tpu.vector_store %arg15[%c6_102, %c0_103], %288 {strides = array<i32>} : memref<16x32xf32, #tpu.memory_space<vmem>>, vector<1x16xf32>,
    %290 = vector.extract_strided_slice %287 {offsets = [0, 16], sizes = [1, 16], strides = [1, 1]} : vector<2x32xf32> to vector<1x16xf32>
    %c1_104 = arith.constant 1 : index
    %c16_105 = arith.constant 16 : index
    %291 = vector.load %arg15[%c1_104, %c16_105] : memref<16x32xf32, #tpu.memory_space<vmem>>, vector<1x16xf32>
    tpu.vector_store %arg15[%c1_104, %c16_105], %290 {strides = array<i32>} : memref<16x32xf32, #tpu.memory_space<vmem>>, vector<1x16xf32>,
    %292 = vector.extract_strided_slice %287 {offsets = [1, 0], sizes = [1, 16], strides = [1, 1]} : vector<2x32xf32> to vector<1x16xf32>
    %c14_106 = arith.constant 14 : index
    %c0_107 = arith.constant 0 : index
    %293 = vector.load %arg15[%c14_106, %c0_107] : memref<16x32xf32, #tpu.memory_space<vmem>>, vector<1x16xf32>
    tpu.vector_store %arg15[%c14_106, %c0_107], %292 {strides = array<i32>} : memref<16x32xf32, #tpu.memory_space<vmem>>, vector<1x16xf32>,
    %294 = vector.extract_strided_slice %287 {offsets = [1, 16], sizes = [1, 16], strides = [1, 1]} : vector<2x32xf32> to vector<1x16xf32>
    %c9_108 = arith.constant 9 : index
    %c16_109 = arith.constant 16 : index
    %295 = vector.load %arg15[%c9_108, %c16_109] : memref<16x32xf32, #tpu.memory_space<vmem>>, vector<1x16xf32>
    tpu.vector_store %arg15[%c9_108, %c16_109], %294 {strides = array<i32>} : memref<16x32xf32, #tpu.memory_space<vmem>>, vector<1x16xf32>,
    %c14_110 = arith.constant 14 : index
    %c0_111 = arith.constant 0 : index
    %296 = vector.load %arg14[%c14_110, %c0_111] : memref<16x128xf32, #tpu.memory_space<vmem>>, vector<2x128xf32>
    %cst_112 = arith.constant dense<0.000000e+00> : vector<2x128xf32>
    %297 = tpu.matmul %285, %16, %cst_112 {dimension_numbers = #tpu.dot_dimension_numbers<[1], [0], [0], [1], [0, 0, 1, 1], [], []>} : vector<2x32xf32>, vector<32x128xf32>, vector<2x128xf32> -> vector<2x128xf32>
    %298 = arith.addf %296, %297 : vector<2x128xf32>
    %299 = arith.negf %298 : vector<2x128xf32>
    %300 = math.exp %299 : vector<2x128xf32>
    %cst_113 = arith.constant 1.000000e+00 : f32
    %301 = vector.broadcast %cst_113 : f32 to vector<2x128xf32>
    %302 = arith.addf %301, %300 : vector<2x128xf32>
    %303 = arith.divf %301, %302 : vector<2x128xf32>
    %304 = vector.extract_strided_slice %303 {offsets = [0, 0], sizes = [2, 32], strides = [1, 1]} : vector<2x128xf32> to vector<2x32xf32>
    %305 = vector.extract_strided_slice %303 {offsets = [0, 32], sizes = [2, 32], strides = [1, 1]} : vector<2x128xf32> to vector<2x32xf32>
    %306 = vector.extract_strided_slice %303 {offsets = [0, 64], sizes = [2, 32], strides = [1, 1]} : vector<2x128xf32> to vector<2x32xf32>
    %cst_114 = arith.constant 2.000000e+00 : f32
    %307 = vector.broadcast %cst_114 : f32 to vector<2x32xf32>
    %308 = arith.mulf %307, %306 : vector<2x32xf32>
    %cst_115 = arith.constant 1.000000e+00 : f32
    %309 = vector.broadcast %cst_115 : f32 to vector<2x32xf32>
    %310 = arith.subf %308, %309 : vector<2x32xf32>
    %311 = vector.extract_strided_slice %303 {offsets = [0, 96], sizes = [2, 32], strides = [1, 1]} : vector<2x128xf32> to vector<2x32xf32>
    %312 = arith.mulf %305, %284 : vector<2x32xf32>
    %313 = arith.mulf %304, %310 : vector<2x32xf32>
    %314 = arith.addf %312, %313 : vector<2x32xf32>
    %315 = math.tanh %314 : vector<2x32xf32>
    %316 = arith.mulf %311, %315 : vector<2x32xf32>
    %c7_i32_116 = arith.constant 7 : i32
    %c0_i32_117 = arith.constant 0 : i32
    %317 = vector.broadcast %c7_i32_116 : i32 to vector<1x32xi32>
    %318 = vector.broadcast %c0_i32_117 : i32 to vector<1x32xi32>
    %319 = arith.select %20, %317, %318 : vector<1x32xi1>, vector<1x32xi32>
    %320 = vector.broadcast %319 : vector<1x32xi32> to vector<2x32xi32>
    %321 = vector.broadcast %17 : vector<2x1xi32> to vector<2x32xi32>
    %322 = arith.cmpi slt, %320, %321 : vector<2x32xi32>
    %cst_118 = arith.constant 0.000000e+00 : f32
    %323 = vector.broadcast %cst_118 : f32 to vector<2x32xf32>
    %324 = arith.select %322, %316, %323 : vector<2x32xi1>, vector<2x32xf32>
    %325 = vector.extract_strided_slice %324 {offsets = [0, 0], sizes = [1, 16], strides = [1, 1]} : vector<2x32xf32> to vector<1x16xf32>
    %c7_119 = arith.constant 7 : index
    %c0_120 = arith.constant 0 : index
    %326 = vector.load %arg15[%c7_119, %c0_120] : memref<16x32xf32, #tpu.memory_space<vmem>>, vector<1x16xf32>
    tpu.vector_store %arg15[%c7_119, %c0_120], %325 {strides = array<i32>} : memref<16x32xf32, #tpu.memory_space<vmem>>, vector<1x16xf32>,
    %327 = vector.extract_strided_slice %324 {offsets = [0, 16], sizes = [1, 16], strides = [1, 1]} : vector<2x32xf32> to vector<1x16xf32>
    %c0_121 = arith.constant 0 : index
    %c16_122 = arith.constant 16 : index
    %328 = vector.load %arg15[%c0_121, %c16_122] : memref<16x32xf32, #tpu.memory_space<vmem>>, vector<1x16xf32>
    tpu.vector_store %arg15[%c0_121, %c16_122], %327 {strides = array<i32>} : memref<16x32xf32, #tpu.memory_space<vmem>>, vector<1x16xf32>,
    %329 = vector.extract_strided_slice %324 {offsets = [1, 0], sizes = [1, 16], strides = [1, 1]} : vector<2x32xf32> to vector<1x16xf32>
    %c15_123 = arith.constant 15 : index
    %c0_124 = arith.constant 0 : index
    %330 = vector.load %arg15[%c15_123, %c0_124] : memref<16x32xf32, #tpu.memory_space<vmem>>, vector<1x16xf32>
    tpu.vector_store %arg15[%c15_123, %c0_124], %329 {strides = array<i32>} : memref<16x32xf32, #tpu.memory_space<vmem>>, vector<1x16xf32>,
    %331 = vector.extract_strided_slice %324 {offsets = [1, 16], sizes = [1, 16], strides = [1, 1]} : vector<2x32xf32> to vector<1x16xf32>
    %c8_125 = arith.constant 8 : index
    %c16_126 = arith.constant 16 : index
    %332 = vector.load %arg15[%c8_125, %c16_126] : memref<16x32xf32, #tpu.memory_space<vmem>>, vector<1x16xf32>
    tpu.vector_store %arg15[%c8_125, %c16_126], %331 {strides = array<i32>} : memref<16x32xf32, #tpu.memory_space<vmem>>, vector<1x16xf32>,
    %c0_127 = arith.constant 0 : index
    %c0_128 = arith.constant 0 : index
    %333 = vector.load %arg15[%c0_127, %c0_128] : memref<16x32xf32, #tpu.memory_space<vmem>>, vector<16x32xf32>
    %c0_129 = arith.constant 0 : index
    %c0_130 = arith.constant 0 : index
    %334 = vector.load %arg7[%c0_129, %c0_130] : memref<32x16xf32, #tpu.memory_space<vmem>>, vector<32x16xf32>
    %cst_131 = arith.constant dense<0.000000e+00> : vector<16x16xf32>
    %335 = tpu.matmul %333, %334, %cst_131 {dimension_numbers = #tpu.dot_dimension_numbers<[1], [0], [0], [1], [0, 0, 1, 1], [], []>} : vector<16x32xf32>, vector<32x16xf32>, vector<16x16xf32> -> vector<16x16xf32>
    %c0_132 = arith.constant 0 : index
    %c0_133 = arith.constant 0 : index
    %336 = vector.load %arg8[%c0_132, %c0_133] : memref<1x16xf32, #tpu.memory_space<vmem>>, vector<1x16xf32>
    %337 = vector.broadcast %336 : vector<1x16xf32> to vector<16x16xf32>
    %338 = arith.addf %335, %337 : vector<16x16xf32>
    %cst_134 = arith.constant 0.000000e+00 : f32
    %339 = vector.broadcast %cst_134 : f32 to vector<16x16xf32>
    %340 = arith.maximumf %338, %339 : vector<16x16xf32>
    %c0_135 = arith.constant 0 : index
    %c0_136 = arith.constant 0 : index
    %341 = vector.load %arg9[%c0_135, %c0_136] : memref<16x2xf32, #tpu.memory_space<vmem>>, vector<16x2xf32>
    %cst_137 = arith.constant dense<0.000000e+00> : vector<16x2xf32>
    %342 = tpu.matmul %340, %341, %cst_137 {dimension_numbers = #tpu.dot_dimension_numbers<[1], [0], [0], [1], [0, 0, 1, 1], [], []>} : vector<16x16xf32>, vector<16x2xf32>, vector<16x2xf32> -> vector<16x2xf32>
    %c0_138 = arith.constant 0 : index
    %c0_139 = arith.constant 0 : index
    %343 = vector.load %arg10[%c0_138, %c0_139] : memref<1x2xf32, #tpu.memory_space<vmem>>, vector<1x2xf32>
    %344 = vector.broadcast %343 : vector<1x2xf32> to vector<16x2xf32>
    %345 = arith.addf %342, %344 : vector<16x2xf32>
    %346 = tpu.iota {dimensions = array<i32: 0>} : vector<8x1xi32>
    %c0_140 = arith.constant 0 : index
    %c0_141 = arith.constant 0 : index
    %347 = vector.load %arg15[%c0_140, %c0_141] : memref<16x32xf32, #tpu.memory_space<vmem>>, vector<8x32xf32>
    %348 = vector.extract_strided_slice %345 {offsets = [0, 0], sizes = [8, 2], strides = [1, 1]} : vector<16x2xf32> to vector<8x2xf32>
    %c0_142 = arith.constant 0 : index
    %349 = memref.load %arg0[%c0_142] : memref<2xi32, #tpu.memory_space<smem>>
    %350 = vector.broadcast %349 : i32 to vector<8x1xi32>
    %351 = arith.cmpi slt, %346, %350 : vector<8x1xi32>
    %cst_143 = arith.constant -1.000000e+30 : f32
    %352 = vector.shape_cast %351 : vector<8x1xi1> to vector<8x1xi1>
    %353 = vector.broadcast %352 : vector<8x1xi1> to vector<8x2xi1>
    %354 = vector.broadcast %cst_143 : f32 to vector<8x2xf32>
    %355 = arith.select %353, %348, %354 : vector<8x2xi1>, vector<8x2xf32>
    %cst_144 = arith.constant dense<0xFF800000> : vector<2xf32>
    %356 = vector.multi_reduction <maximumf>, %355, %cst_144 [0] : vector<8x2xf32> to vector<2xf32>
    %357 = vector.shape_cast %356 : vector<2xf32> to vector<1x2xf32>
    %358 = vector.broadcast %357 : vector<1x2xf32> to vector<8x2xf32>
    %359 = arith.subf %355, %358 : vector<8x2xf32>
    %360 = math.exp %359 : vector<8x2xf32>
    %cst_145 = arith.constant 0.000000e+00 : f32
    %361 = vector.shape_cast %351 : vector<8x1xi1> to vector<8x1xi1>
    %362 = vector.broadcast %361 : vector<8x1xi1> to vector<8x2xi1>
    %363 = vector.broadcast %cst_145 : f32 to vector<8x2xf32>
    %364 = arith.select %362, %360, %363 : vector<8x2xi1>, vector<8x2xf32>
    %cst_146 = arith.constant dense<0.000000e+00> : vector<2xf32>
    %365 = vector.multi_reduction <add>, %364, %cst_146 [0] : vector<8x2xf32> to vector<2xf32>
    %366 = vector.shape_cast %365 : vector<2xf32> to vector<1x2xf32>
    %367 = vector.broadcast %366 : vector<1x2xf32> to vector<8x2xf32>
    %368 = arith.divf %364, %367 : vector<8x2xf32>
    %cst_147 = arith.constant dense<0.000000e+00> : vector<2x32xf32>
    %369 = tpu.matmul %368, %347, %cst_147 {dimension_numbers = #tpu.dot_dimension_numbers<[0], [0], [1], [1], [0, 1, 1, 1], [], []>} : vector<8x2xf32>, vector<8x32xf32>, vector<2x32xf32> -> vector<2x32xf32>
    %370 = vector.extract_strided_slice %369 {offsets = [0, 0], sizes = [1, 32], strides = [1, 1]} : vector<2x32xf32> to vector<1x32xf32>
    %371 = vector.extract_strided_slice %369 {offsets = [1, 0], sizes = [1, 32], strides = [1, 1]} : vector<2x32xf32> to vector<1x32xf32>
    %372 = tpu.concatenate %370, %371 in 1 : vector<1x32xf32>, vector<1x32xf32> -> vector<1x64xf32>
    %c8_148 = arith.constant 8 : index
    %c0_149 = arith.constant 0 : index
    %373 = vector.load %arg15[%c8_148, %c0_149] : memref<16x32xf32, #tpu.memory_space<vmem>>, vector<8x32xf32>
    %374 = vector.extract_strided_slice %345 {offsets = [8, 0], sizes = [8, 2], strides = [1, 1]} : vector<16x2xf32> to vector<8x2xf32>
    %c1_150 = arith.constant 1 : index
    %375 = memref.load %arg0[%c1_150] : memref<2xi32, #tpu.memory_space<smem>>
    %376 = vector.broadcast %375 : i32 to vector<8x1xi32>
    %377 = arith.cmpi slt, %346, %376 : vector<8x1xi32>
    %cst_151 = arith.constant -1.000000e+30 : f32
    %378 = vector.shape_cast %377 : vector<8x1xi1> to vector<8x1xi1>
    %379 = vector.broadcast %378 : vector<8x1xi1> to vector<8x2xi1>
    %380 = vector.broadcast %cst_151 : f32 to vector<8x2xf32>
    %381 = arith.select %379, %374, %380 : vector<8x2xi1>, vector<8x2xf32>
    %cst_152 = arith.constant dense<0xFF800000> : vector<2xf32>
    %382 = vector.multi_reduction <maximumf>, %381, %cst_152 [0] : vector<8x2xf32> to vector<2xf32>
    %383 = vector.shape_cast %382 : vector<2xf32> to vector<1x2xf32>
    %384 = vector.broadcast %383 : vector<1x2xf32> to vector<8x2xf32>
    %385 = arith.subf %381, %384 : vector<8x2xf32>
    %386 = math.exp %385 : vector<8x2xf32>
    %cst_153 = arith.constant 0.000000e+00 : f32
    %387 = vector.shape_cast %377 : vector<8x1xi1> to vector<8x1xi1>
    %388 = vector.broadcast %387 : vector<8x1xi1> to vector<8x2xi1>
    %389 = vector.broadcast %cst_153 : f32 to vector<8x2xf32>
    %390 = arith.select %388, %386, %389 : vector<8x2xi1>, vector<8x2xf32>
    %cst_154 = arith.constant dense<0.000000e+00> : vector<2xf32>
    %391 = vector.multi_reduction <add>, %390, %cst_154 [0] : vector<8x2xf32> to vector<2xf32>
    %392 = vector.shape_cast %391 : vector<2xf32> to vector<1x2xf32>
    %393 = vector.broadcast %392 : vector<1x2xf32> to vector<8x2xf32>
    %394 = arith.divf %390, %393 : vector<8x2xf32>
    %cst_155 = arith.constant dense<0.000000e+00> : vector<2x32xf32>
    %395 = tpu.matmul %394, %373, %cst_155 {dimension_numbers = #tpu.dot_dimension_numbers<[0], [0], [1], [1], [0, 1, 1, 1], [], []>} : vector<8x2xf32>, vector<8x32xf32>, vector<2x32xf32> -> vector<2x32xf32>
    %396 = vector.extract_strided_slice %395 {offsets = [0, 0], sizes = [1, 32], strides = [1, 1]} : vector<2x32xf32> to vector<1x32xf32>
    %397 = vector.extract_strided_slice %395 {offsets = [1, 0], sizes = [1, 32], strides = [1, 1]} : vector<2x32xf32> to vector<1x32xf32>
    %398 = tpu.concatenate %396, %397 in 1 : vector<1x32xf32>, vector<1x32xf32> -> vector<1x64xf32>
    %399 = tpu.concatenate %372, %398 in 0 : vector<1x64xf32>, vector<1x64xf32> -> vector<2x64xf32>
    %c0_156 = arith.constant 0 : index
    %c0_157 = arith.constant 0 : index
    %400 = vector.load %arg11[%c0_156, %c0_157] : memref<64x2xf32, #tpu.memory_space<vmem>>, vector<64x2xf32>
    %cst_158 = arith.constant dense<0.000000e+00> : vector<2x2xf32>
    %401 = tpu.matmul %399, %400, %cst_158 {dimension_numbers = #tpu.dot_dimension_numbers<[1], [0], [0], [1], [0, 0, 1, 1], [], []>} : vector<2x64xf32>, vector<64x2xf32>, vector<2x2xf32> -> vector<2x2xf32>
    %c0_159 = arith.constant 0 : index
    %c0_160 = arith.constant 0 : index
    %402 = vector.load %arg12[%c0_159, %c0_160] : memref<1x2xf32, #tpu.memory_space<vmem>>, vector<1x2xf32>
    %403 = vector.broadcast %402 : vector<1x2xf32> to vector<2x2xf32>
    %404 = arith.addf %401, %403 : vector<2x2xf32>
    %cst_161 = arith.constant dense<0xFF800000> : vector<2xf32>
    %405 = vector.multi_reduction <maximumf>, %404, %cst_161 [1] : vector<2x2xf32> to vector<2xf32>
    %406 = vector.shape_cast %405 : vector<2xf32> to vector<2x1xf32>
    %407 = vector.broadcast %406 : vector<2x1xf32> to vector<2x2xf32>
    %408 = arith.subf %404, %407 : vector<2x2xf32>
    %409 = math.exp %408 : vector<2x2xf32>
    %cst_162 = arith.constant dense<0.000000e+00> : vector<2xf32>
    %410 = vector.multi_reduction <add>, %409, %cst_162 [1] : vector<2x2xf32> to vector<2xf32>
    %411 = vector.shape_cast %410 : vector<2xf32> to vector<2x1xf32>
    %412 = vector.broadcast %411 : vector<2x1xf32> to vector<2x2xf32>
    %413 = arith.divf %409, %412 : vector<2x2xf32>
    %c0_163 = arith.constant 0 : index
    %c0_164 = arith.constant 0 : index
    %414 = vector.load %arg13[%c0_163, %c0_164] : memref<2x2xf32, #tpu.memory_space<vmem>>, vector<2x2xf32>
    tpu.vector_store %arg13[%c0_163, %c0_164], %413 {strides = array<i32>} : memref<2x2xf32, #tpu.memory_space<vmem>>, vector<2x2xf32>,
    return
  }
}

</mosaic_0001>

<llo_original>
// kernel: eeap_forward.1
$region0: #{eeap_forward.1}
  #allocation0 [shape = 'u32[]', space=smem, size = 0x4, offset = 0x4, fixed_abs, tag = 'smem constant byte address 0x4 - core index']
  #allocation1 [shape = 'u32[144,128]{1,0:T(1,128)}', space=vmem, size = 0x12000, scoped, tag = 'internal scratch']
  #allocation2 [shape = 'f32[16,128]{1,0:T(8,128)}', space=vmem, size = 0x2000, scoped, tag = 'scratch operand']
  #allocation3 [shape = 'f32[16,32]{1,0:T(8,128)}', space=vmem, size = 0x2000, scoped, tag = 'scratch operand']
  %s0 = inlined_call_operand.vmem [shape: s32[2], index: 0, kind: input, shape index: {}]
  %s1 = inlined_call_operand.vmem [shape: s32[2,1], index: 1, kind: input, shape index: {}]
  %s2 = inlined_call_operand.vmem [shape: s32[16,1], index: 2, kind: input, shape index: {}]
  %s3 = inlined_call_operand.vmem [shape: s32[16,1], index: 3, kind: input, shape index: {}]
  %s4 = inlined_call_operand.vmem [shape: f32[40,128], index: 4, kind: input, shape index: {}]
  %s5 = inlined_call_operand.vmem [shape: f32[32,128], index: 5, kind: input, shape index: {}]
  %s6 = inlined_call_operand.vmem [shape: f32[1,128], index: 6, kind: input, shape index: {}]
  %s7 = inlined_call_operand.vmem [shape: f32[32,16], index: 7, kind: input, shape index: {}]
  %s8 = inlined_call_operand.vmem [shape: f32[1,16], index: 8, kind: input, shape index: {}]
  %s9 = inlined_call_operand.vmem [shape: f32[16,2], index: 9, kind: input, shape index: {}]
  %s10 = inlined_call_operand.vmem [shape: f32[1,2], index: 10, kind: input, shape index: {}]
  %s11 = inlined_call_operand.vmem [shape: f32[64,2], index: 11, kind: input, shape index: {}]
  %s12 = inlined_call_operand.vmem [shape: f32[1,2], index: 12, kind: input, shape index: {}]
  %s13 = inlined_call_operand.hbm [shape: f32[2,2], index: 13, kind: output, shape index: {}]
  %s14 = sld [smem:[#allocation0]]
  $region66: #{eeap_forward.1} parent=0
    _
  %s16 = ssub.s32 1, %s14
  %s17 = scalar_select 0, %s16, %s14
  $region1: #{eeap_forward.1} parent=0
    #allocation4 [shape = 'u8[512]{0}', space=smem, size = 0x200, scoped, tag = 'input window, operand 0, single buffered']
    #allocation5 [shape = 's32[1]{0}', space=sflag, size = 0x4, scoped, tag = 'scoped memory for eeap_forward.1']
    #allocation6 [shape = 's32[1]{0}', space=sflag, size = 0x4, scoped, tag = 'scoped memory for eeap_forward.1']
    #allocation7 [shape = 'u8[1024]{0}', space=vmem, size = 0x400, scoped, tag = 'output window, operand 0, single buffered']
    %18 = vsyncpa [#allocation6], 0
    %19 = vsyncpa [#allocation5], 0
    // Predicated region
    $region2: #{eeap_forward.1} parent=1 // pred_check
      _
    $region3: #{eeap_forward.1} parent=1 // pred_check_branch
      %21 = sbr.rel (0) target = $region5
    $region4: #{eeap_forward.1} parent=1 // pred_region
      %s23 = ssub.s32 16, 16
      %24 = vsyncadd [#allocation6], %s23
      %s26 = sshll.u32 %s0, 4
      %s27 = int_to_ptr.vmem [resolvable:$true] %s26
      %29 = dma.vmem_to_smem %s27, 16, [#allocation4], [#allocation6]
    $region5: #{eeap_forward.1} parent=1 // pred_fallthru
      _
    // Predicated region
    $region6: #{eeap_forward.1} parent=1 // pred_check
      _
    $region7: #{eeap_forward.1} parent=1 // pred_check_branch
      %31 = sbr.rel (0) target = $region9
    $region8: #{eeap_forward.1} parent=1 // pred_region
      _
    $region9: #{eeap_forward.1} parent=1 // pred_fallthru
      _
    // Predicated region
    $region10: #{eeap_forward.1} parent=1 // pred_check
      _
    $region11: #{eeap_forward.1} parent=1 // pred_check_branch
      %33 = sbr.rel (0) target = $region13
    $region12: #{eeap_forward.1} parent=1 // pred_region
      _
    $region13: #{eeap_forward.1} parent=1 // pred_fallthru
      _
    // Predicated region
    $region14: #{eeap_forward.1} parent=1 // pred_check
      _
    $region15: #{eeap_forward.1} parent=1 // pred_check_branch
      %35 = sbr.rel (0) target = $region17
    $region16: #{eeap_forward.1} parent=1 // pred_region
      _
    $region17: #{eeap_forward.1} parent=1 // pred_fallthru
      _
    // Predicated region
    $region18: #{eeap_forward.1} parent=1 // pred_check
      _
    $region19: #{eeap_forward.1} parent=1 // pred_check_branch
      %37 = sbr.rel (0) target = $region21
    $region20: #{eeap_forward.1} parent=1 // pred_region
      _
    $region21: #{eeap_forward.1} parent=1 // pred_fallthru
      _
    // Predicated region
    $region22: #{eeap_forward.1} parent=1 // pred_check
      _
    $region23: #{eeap_forward.1} parent=1 // pred_check_branch
      %39 = sbr.rel (0) target = $region25
    $region24: #{eeap_forward.1} parent=1 // pred_region
      _
    $region25: #{eeap_forward.1} parent=1 // pred_fallthru
      _
    // Predicated region
    $region26: #{eeap_forward.1} parent=1 // pred_check
      _
    $region27: #{eeap_forward.1} parent=1 // pred_check_branch
      %41 = sbr.rel (0) target = $region29
    $region28: #{eeap_forward.1} parent=1 // pred_region
      _
    $region29: #{eeap_forward.1} parent=1 // pred_fallthru
      _
    // Predicated region
    $region30: #{eeap_forward.1} parent=1 // pred_check
      _
    $region31: #{eeap_forward.1} parent=1 // pred_check_branch
      %43 = sbr.rel (0) target = $region33
    $region32: #{eeap_forward.1} parent=1 // pred_region
      _
    $region33: #{eeap_forward.1} parent=1 // pred_fallthru
      _
    // Predicated region
    $region34: #{eeap_forward.1} parent=1 // pred_check
      _
    $region35: #{eeap_forward.1} parent=1 // pred_check_branch
      %45 = sbr.rel (0) target = $region37
    $region36: #{eeap_forward.1} parent=1 // pred_region
      _
    $region37: #{eeap_forward.1} parent=1 // pred_fallthru
      _
    // Predicated region
    $region38: #{eeap_forward.1} parent=1 // pred_check
      _
    $region39: #{eeap_forward.1} parent=1 // pred_check_branch
      %47 = sbr.rel (0) target = $region41
    $region40: #{eeap_forward.1} parent=1 // pred_region
      _
    $region41: #{eeap_forward.1} parent=1 // pred_fallthru
      _
    // Predicated region
    $region42: #{eeap_forward.1} parent=1 // pred_check
      _
    $region43: #{eeap_forward.1} parent=1 // pred_check_branch
      %49 = sbr.rel (0) target = $region45
    $region44: #{eeap_forward.1} parent=1 // pred_region
      _
    $region45: #{eeap_forward.1} parent=1 // pred_fallthru
      _
    // Predicated region
    $region46: #{eeap_forward.1} parent=1 // pred_check
      _
    $region47: #{eeap_forward.1} parent=1 // pred_check_branch
      %51 = sbr.rel (0) target = $region49
    $region48: #{eeap_forward.1} parent=1 // pred_region
      _
    $region49: #{eeap_forward.1} parent=1 // pred_fallthru
      _
    // Predicated region
    $region50: #{eeap_forward.1} parent=1 // pred_check
      _
    $region51: #{eeap_forward.1} parent=1 // pred_check_branch
      %53 = sbr.rel (0) target = $region53
    $region52: #{eeap_forward.1} parent=1 // pred_region
      _
    $region53: #{eeap_forward.1} parent=1 // pred_fallthru
      _
    // Predicated region
    $region54: #{eeap_forward.1} parent=1 // pred_check
      _
    $region55: #{eeap_forward.1} parent=1 // pred_check_branch
      %55 = sbr.rel (0) target = $region57
    $region56: #{eeap_forward.1} parent=1 // pred_region
      %56 = dma.done [#allocation6], 16
    $region57: #{eeap_forward.1} parent=1 // pred_fallthru
      _
    %57 = sfence
    %v58 = vlaneseq
    %v59 = vand.u32 %v58, 127
    %v60 = vld [vmem:[%s2] sm:$0xff]
    %v61 = vld [vmem:[%s2 + $0x8] sm:$0xff]
    %62 = vset.pattern.permute.xlu0 0
    %63 = vperm.xlu0 %62, %v60
    %v64 = vpop.permute.xlu0 %63
    %65 = vset.pattern.permute.xlu0 0
    %66 = vperm.xlu0 %65, %v61
    %v67 = vpop.permute.xlu0 %66
    %vm68 = vcmp.eq.s32.totalorder %v59, %v64
    %vm69 = vcmp.eq.s32.totalorder %v59, %v67
    %v70 = vld [vmem:[%s3] sm:$0xff]
    %v71 = vld [vmem:[%s3 + $0x8] sm:$0xff]
    %72 = vset.pattern.permute.xlu0 0
    %73 = vperm.xlu0 %72, %v70
    %v74 = vpop.permute.xlu0 %73
    %75 = vset.pattern.permute.xlu0 0
    %76 = vperm.xlu0 %75, %v71
    %v77 = vpop.permute.xlu0 %76
    %vm78 = vcmp.eq.s32.totalorder %v59, %v74
    %vm79 = vcmp.eq.s32.totalorder %v59, %v77
    %vm80 = vmor %vm68, %vm78
    %vm81 = vmor %vm69, %vm79
    %v82 = vsel %vm80, 1, 0
    %v83 = vsel %vm81, 1, 0
    %v84 = vcvt.s32.f32 %v82
    %v85 = vcvt.s32.f32 %v83
    %v86 = vld [vmem:[%s4] sm:$0xff]
    %v87 = vld [vmem:[%s4 + $0x8] sm:$0xff]
    %v88 = vld [vmem:[%s4 + $0x10] sm:$0xff]
    %v89 = vld [vmem:[%s4 + $0x18] sm:$0xff]
    %v90 = vld [vmem:[%s4 + $0x20] sm:$0xff]
    %v91 = vld [vmem:[%s6] sm:$0x1]
    %v93 = vlaneseq
    %v94 = vshrl.u32 %v93, 7
    %v95 = vsub.s32 0, %v94
    %v96 = vrot.slane %v91, %v95
    %vm98 = vcmask 326656
    %v100 = vsel %vm98, %v84, 0
    %v103 = vsel %vm98, %v85, 0
    %105 = vmatprep.subr.mxu0 0.0
    %106 = vmatpush1.msra.mxu0 %v86
    %107 = vmatprep.subr.mxu0 0.0
    %108 = vmatpush1.msra.mxu0 %v87
    %109 = vmatprep.subr.mxu0 0.0
    %110 = vmatpush1.msra.mxu0 %v88
    %111 = vmatprep.subr.mxu0 0.0
    %112 = vmatpush1.msra.mxu0 %v89
    %113 = vmatprep.subr.mxu0 0.0
    %114 = vmatpush1.msra.mxu0 %v90
    %115 = vmatprep.subr.mxu0 0.0
    %116 = vmatpush1.msra.mxu0 0.0
    %117 = vmatprep.subr.mxu0 0.0
    %118 = vmatpush1.msra.mxu0 0.0
    %119 = vmatprep.subr.mxu0 0.0
    %120 = vmatpush1.msra.mxu0 0.0
    %121 = vmatprep.subr.mxu0 0.0
    %122 = vmatpush1.msra.mxu0 0.0
    %123 = vmatprep.subr.mxu0 0.0
    %124 = vmatpush1.msra.mxu0 0.0
    %125 = vmatprep.subr.mxu0 0.0
    %126 = vmatpush1.msra.mxu0 0.0
    %127 = vmatprep.subr.mxu0 0.0
    %128 = vmatpush1.msra.mxu0 0.0
    %129 = vmatprep.subr.mxu0 0.0
    %130 = vmatpush1.msra.mxu0 0.0
    %131 = vmatprep.subr.mxu0 0.0
    %132 = vmatpush1.msra.mxu0 0.0
    %133 = vmatprep.subr.mxu0 0.0
    %134 = vmatpush1.msra.mxu0 0.0
    %135 = vmatprep.subr.mxu0 0.0
    %136 = vmatpush1.msra.mxu0 0.0
    %137 = vmatprep.subr.mxu0 0.0
    %138 = vmatpush1.msra.mxu0 0.0
    %139 = vmatprep.subr.mxu0 0.0
    %140 = vmatpush1.msra.mxu0 0.0
    %141 = vmatprep.subr.mxu0 0.0
    %142 = vmatpush1.msra.mxu0 0.0
    %143 = vmatprep.subr.mxu0 0.0
    %144 = vmatpush1.msra.mxu0 0.0
    %145 = vmatprep.subr.mxu0 0.0
    %146 = vmatpush1.msra.mxu0 0.0
    %147 = vmatprep.subr.mxu0 0.0
    %148 = vmatpush1.msra.mxu0 0.0
    %149 = vmatprep.subr.mxu0 0.0
    %150 = vmatpush1.msra.mxu0 0.0
    %151 = vmatprep.subr.mxu0 0.0
    %152 = vmatpush1.msra.mxu0 0.0
    %153 = vmatprep.subr.mxu0 0.0
    %154 = vmatpush1.msra.mxu0 0.0
    %155 = vmatprep.subr.mxu0 0.0
    %156 = vmatpush1.msra.mxu0 0.0
    %157 = vmatprep.subr.mxu0 0.0
    %158 = vmatpush1.msra.mxu0 0.0
    %159 = vmatprep.subr.mxu0 0.0
    %160 = vmatpush1.msra.mxu0 0.0
    %161 = vmatprep.subr.mxu0 0.0
    %162 = vmatpush1.msra.mxu0 0.0
    %163 = vmatprep.subr.mxu0 0.0
    %164 = vmatpush1.msra.mxu0 0.0
    %165 = vmatprep.subr.mxu0 0.0
    %166 = vmatpush1.msra.mxu0 0.0
    %167 = vmatprep.subr.mxu0 0.0
    %168 = vmatpush1.msra.mxu0 0.0
    %169 = vmatprep.mubr.f32.mxu0 0.0
    %170 = vmatmul.mubr.f32.gmra.mrb[0].mxu0 %v100
    %v171 = vpop.f32.mrb[0].mxu0
    %v172 = vadd.f32 %v96, %v171
    %v173 = vpop.f32.mrb[0].mxu0
    %174 = vmatprep.mubr.f32.mxu0 0.0
    %175 = vmatmul.mubr.f32.gmra.mrb[0].mxu0 %v103
    %v176 = vpop.f32.mrb[0].mxu0
    %v177 = vadd.f32 %v96, %v176
    %v178 = vpop.f32.mrb[0].mxu0
    %179 = vdwg.mxu0
    %180 = vst [vmem:[#allocation2] sm:$0xff] %v172
    %181 = vst [vmem:[#allocation2 + $0x8] sm:$0xff] %v177
    %v182 = vld [vmem:[%s5] sm:$0xff]
    %v183 = vld [vmem:[%s5 + $0x8] sm:$0xff]
    %v184 = vld [vmem:[%s5 + $0x10] sm:$0xff]
    %v185 = vld [vmem:[%s5 + $0x18] sm:$0xff]
    %v186 = vld [vmem:[%s1] sm:$0x3]
    %vm187 = vcmp.lt.s32.totalorder %v59, 16
    %v188 = vld [vmem:[#allocation2] sm:$0x3]
    %vm189 = vcmask 261120
    %v191 = vsel %vm189, 0.0, 0
    %193 = vmatprep.subr.mxu0 0.0
    %194 = vmatpush1.msra.mxu0 %v182
    %195 = vmatprep.subr.mxu0 0.0
    %196 = vmatpush1.msra.mxu0 %v183
    %197 = vmatprep.subr.mxu0 0.0
    %198 = vmatpush1.msra.mxu0 %v184
    %199 = vmatprep.subr.mxu0 0.0
    %200 = vmatpush1.msra.mxu0 %v185
    %201 = vmatprep.subr.mxu0 0.0
    %202 = vmatpush1.msra.mxu0 0.0
    %203 = vmatprep.subr.mxu0 0.0
    %204 = vmatpush1.msra.mxu0 0.0
    %205 = vmatprep.subr.mxu0 0.0
    %206 = vmatpush1.msra.mxu0 0.0
    %207 = vmatprep.subr.mxu0 0.0
    %208 = vmatpush1.msra.mxu0 0.0
    %209 = vmatprep.subr.mxu0 0.0
    %210 = vmatpush1.msra.mxu0 0.0
    %211 = vmatprep.subr.mxu0 0.0
    %212 = vmatpush1.msra.mxu0 0.0
    %213 = vmatprep.subr.mxu0 0.0
    %214 = vmatpush1.msra.mxu0 0.0
    %215 = vmatprep.subr.mxu0 0.0
    %216 = vmatpush1.msra.mxu0 0.0
    %217 = vmatprep.subr.mxu0 0.0
    %218 = vmatpush1.msra.mxu0 0.0
    %219 = vmatprep.subr.mxu0 0.0
    %220 = vmatpush1.msra.mxu0 0.0
    %221 = vmatprep.subr.mxu0 0.0
    %222 = vmatpush1.msra.mxu0 0.0
    %223 = vmatprep.subr.mxu0 0.0
    %224 = vmatpush1.msra.mxu0 0.0
    %225 = vmatprep.subr.mxu0 0.0
    %226 = vmatpush1.msra.mxu0 0.0
    %227 = vmatprep.subr.mxu0 0.0
    %228 = vmatpush1.msra.mxu0 0.0
    %229 = vmatprep.subr.mxu0 0.0
    %230 = vmatpush1.msra.mxu0 0.0
    %231 = vmatprep.subr.mxu0 0.0
    %232 = vmatpush1.msra.mxu0 0.0
    %233 = vmatprep.subr.mxu0 0.0
    %234 = vmatpush1.msra.mxu0 0.0
    %235 = vmatprep.subr.mxu0 0.0
    %236 = vmatpush1.msra.mxu0 0.0
    %237 = vmatprep.subr.mxu0 0.0
    %238 = vmatpush1.msra.mxu0 0.0
    %239 = vmatprep.subr.mxu0 0.0
    %240 = vmatpush1.msra.mxu0 0.0
    %241 = vmatprep.subr.mxu0 0.0
    %242 = vmatpush1.msra.mxu0 0.0
    %243 = vmatprep.subr.mxu0 0.0
    %244 = vmatpush1.msra.mxu0 0.0
    %245 = vmatprep.subr.mxu0 0.0
    %246 = vmatpush1.msra.mxu0 0.0
    %247 = vmatprep.subr.mxu0 0.0
    %248 = vmatpush1.msra.mxu0 0.0
    %249 = vmatprep.subr.mxu0 0.0
    %250 = vmatpush1.msra.mxu0 0.0
    %251 = vmatprep.subr.mxu0 0.0
    %252 = vmatpush1.msra.mxu0 0.0
    %253 = vmatprep.subr.mxu0 0.0
    %254 = vmatpush1.msra.mxu0 0.0
    %255 = vmatprep.subr.mxu0 0.0
    %256 = vmatpush1.msra.mxu0 0.0
    %257 = vmatprep.mubr.f32.mxu0 0.0
    %258 = vmatmul.mubr.f32.gmra.mrb[0].mxu0 %v191
    %v259 = vpop.f32.mrb[0].mxu0
    %v260 = vadd.f32 0.0, %v259
    %v261 = vpop.f32.mrb[0].mxu0
    %262 = vdwg.mxu0
    %v263 = vadd.f32 %v188, %v260
    %v264 = vxor.u32 %v263, 2147483648
    %v265 = vmul.f32 %v264, 1.442695
    %v266 = vpow.pop %v265
    %v267 = vadd.f32 %v266, 1.0
    %v268 = vrcp.pop %v267
    %v269 = vmul.f32 1.0, %v268
    %v270 = vmul.f32 %v269, 2.0
    %v271 = vsub.f32 %v270, 1.0
    %v272 = vmul.f32 %v269, 0.0
    %274 = vrot.lane.b32.xlu0 %v271, 64
    %v275 = vpop.permute.xlu0 %274
    %v277 = vmul.f32 %v269, %v275
    %279 = vrot.lane.b32.xlu0 %v277, 32
    %v280 = vpop.permute.xlu0 %279
    %v282 = vadd.f32 %v272, %v280
    %v283 = vtanh.pop %v282
    %285 = vrot.lane.b32.xlu0 %v283, 64
    %v286 = vpop.permute.xlu0 %285
    %v288 = vmul.f32 %v269, %v286
    %v289 = vsel %vm187, 0, 7
    %290 = vset.pattern.permute.xlu0 0
    %291 = vperm.xlu0 %290, %v186
    %v292 = vpop.permute.xlu0 %291
    %vm293 = vcmp.lt.s32.totalorder %v289, %v292
    %295 = vrot.lane.b32.xlu0 %v282, 96
    %v296 = vpop.permute.xlu0 %295
    %v298 = vsel %vm293, %v296, 0.0
    %300 = vrot.lane.b32.xlu0 %v288, 32
    %v301 = vpop.permute.xlu0 %300
    %v303 = vsel %vm293, %v301, 0.0
    %vm304 = vcmask 122880
    %305 = vst.msk [vmem:[#allocation3] sm:$0x1] %vm304, %v303
    %vm306 = vcmask 254080
    %307 = vst.msk [vmem:[#allocation3 + $0x7] sm:$0x1] %vm306, %v303
    %vm308 = vcmask 123905
    %309 = vst.msk [vmem:[#allocation3 + $0x7] sm:$0x2] %vm308, %v303
    %vm310 = vcmask 255105
    %311 = vst.msk [vmem:[#allocation3 + $0xe] sm:$0x2] %vm310, %v303
    %v312 = vld [vmem:[#allocation2 + $0x2] sm:$0x3]
    %v314 = vsel %vm189, %v303, 0
    %316 = vmatprep.subr.mxu0 0.0
    %317 = vmatpush1.msra.mxu0 %v182
    %318 = vmatprep.subr.mxu0 0.0
    %319 = vmatpush1.msra.mxu0 %v183
    %320 = vmatprep.subr.mxu0 0.0
    %321 = vmatpush1.msra.mxu0 %v184
    %322 = vmatprep.subr.mxu0 0.0
    %323 = vmatpush1.msra.mxu0 %v185
    %324 = vmatprep.subr.mxu0 0.0
    %325 = vmatpush1.msra.mxu0 0.0
    %326 = vmatprep.subr.mxu0 0.0
    %327 = vmatpush1.msra.mxu0 0.0
    %328 = vmatprep.subr.mxu0 0.0
    %329 = vmatpush1.msra.mxu0 0.0
    %330 = vmatprep.subr.mxu0 0.0
    %331 = vmatpush1.msra.mxu0 0.0
    %332 = vmatprep.subr.mxu0 0.0
    %333 = vmatpush1.msra.mxu0 0.0
    %334 = vmatprep.subr.mxu0 0.0
    %335 = vmatpush1.msra.mxu0 0.0
    %336 = vmatprep.subr.mxu0 0.0
    %337 = vmatpush1.msra.mxu0 0.0
    %338 = vmatprep.subr.mxu0 0.0
    %339 = vmatpush1.msra.mxu0 0.0
    %340 = vmatprep.subr.mxu0 0.0
    %341 = vmatpush1.msra.mxu0 0.0
    %342 = vmatprep.subr.mxu0 0.0
    %343 = vmatpush1.msra.mxu0 0.0
    %344 = vmatprep.subr.mxu0 0.0
    %345 = vmatpush1.msra.mxu0 0.0
    %346 = vmatprep.subr.mxu0 0.0
    %347 = vmatpush1.msra.mxu0 0.0
    %348 = vmatprep.subr.mxu0 0.0
    %349 = vmatpush1.msra.mxu0 0.0
    %350 = vmatprep.subr.mxu0 0.0
    %351 = vmatpush1.msra.mxu0 0.0
    %352 = vmatprep.subr.mxu0 0.0
    %353 = vmatpush1.msra.mxu0 0.0
    %354 = vmatprep.subr.mxu0 0.0
    %355 = vmatpush1.msra.mxu0 0.0
    %356 = vmatprep.subr.mxu0 0.0
    %357 = vmatpush1.msra.mxu0 0.0
    %358 = vmatprep.subr.mxu0 0.0
    %359 = vmatpush1.msra.mxu0 0.0
    %360 = vmatprep.subr.mxu0 0.0
    %361 = vmatpush1.msra.mxu0 0.0
    %362 = vmatprep.subr.mxu0 0.0
    %363 = vmatpush1.msra.mxu0 0.0
    %364 = vmatprep.subr.mxu0 0.0
    %365 = vmatpush1.msra.mxu0 0.0
    %366 = vmatprep.subr.mxu0 0.0
    %367 = vmatpush1.msra.mxu0 0.0
    %368 = vmatprep.subr.mxu0 0.0
    %369 = vmatpush1.msra.mxu0 0.0
    %370 = vmatprep.subr.mxu0 0.0
    %371 = vmatpush1.msra.mxu0 0.0
    %372 = vmatprep.subr.mxu0 0.0
    %373 = vmatpush1.msra.mxu0 0.0
    %374 = vmatprep.subr.mxu0 0.0
    %375 = vmatpush1.msra.mxu0 0.0
    %376 = vmatprep.subr.mxu0 0.0
    %377 = vmatpush1.msra.mxu0 0.0
    %378 = vmatprep.subr.mxu0 0.0
    %379 = vmatpush1.msra.mxu0 0.0
    %380 = vmatprep.mubr.f32.mxu0 0.0
    %381 = vmatmul.mubr.f32.gmra.mrb[0].mxu0 %v314
    %v382 = vpop.f32.mrb[0].mxu0
    %v383 = vadd.f32 0.0, %v382
    %v384 = vpop.f32.mrb[0].mxu0
    %385 = vdwg.mxu0
    %v386 = vadd.f32 %v312, %v383
    %v387 = vxor.u32 %v386, 2147483648
    %v388 = vmul.f32 %v387, 1.442695
    %v389 = vpow.pop %v388
    %v390 = vadd.f32 %v389, 1.0
    %v391 = vrcp.pop %v390
    %v392 = vmul.f32 1.0, %v391
    %v393 = vmul.f32 %v392, 2.0
    %v394 = vsub.f32 %v393, 1.0
    %396 = vrot.lane.b32.xlu0 %v298, 32
    %v397 = vpop.permute.xlu0 %396
    %v399 = vmul.f32 %v392, %v397
    %401 = vrot.lane.b32.xlu0 %v394, 64
    %v402 = vpop.permute.xlu0 %401
    %v404 = vmul.f32 %v392, %v402
    %406 = vrot.lane.b32.xlu0 %v404, 32
    %v407 = vpop.permute.xlu0 %406
    %v409 = vadd.f32 %v399, %v407
    %v410 = vtanh.pop %v409
    %412 = vrot.lane.b32.xlu0 %v410, 64
    %v413 = vpop.permute.xlu0 %412
    %v415 = vmul.f32 %v392, %v413
    %v416 = vsel %vm187, 1, 6
    %vm417 = vcmp.lt.s32.totalorder %v416, %v292
    %419 = vrot.lane.b32.xlu0 %v409, 96
    %v420 = vpop.permute.xlu0 %419
    %v422 = vsel %vm417, %v420, %v298
    %424 = vrot.lane.b32.xlu0 %v415, 32
    %v425 = vpop.permute.xlu0 %424
    %v427 = vsel %vm417, %v425, %v303
    %v428 = vsel %vm417, %v425, 0.0
    %429 = vst.msk [vmem:[#allocation3 + $0x1] sm:$0x1] %vm304, %v428
    %430 = vst.msk [vmem:[#allocation3 + $0x6] sm:$0x1] %vm306, %v428
    %431 = vst.msk [vmem:[#allocation3 + $0x8] sm:$0x2] %vm308, %v428
    %432 = vst.msk [vmem:[#allocation3 + $0xd] sm:$0x2] %vm310, %v428
    %v433 = vld [vmem:[#allocation2 + $0x4] sm:$0x3]
    %v435 = vsel %vm189, %v427, 0
    %437 = vmatprep.subr.mxu0 0.0
    %438 = vmatpush1.msra.mxu0 %v182
    %439 = vmatprep.subr.mxu0 0.0
    %440 = vmatpush1.msra.mxu0 %v183
    %441 = vmatprep.subr.mxu0 0.0
    %442 = vmatpush1.msra.mxu0 %v184
    %443 = vmatprep.subr.mxu0 0.0
    %444 = vmatpush1.msra.mxu0 %v185
    %445 = vmatprep.subr.mxu0 0.0
    %446 = vmatpush1.msra.mxu0 0.0
    %447 = vmatprep.subr.mxu0 0.0
    %448 = vmatpush1.msra.mxu0 0.0
    %449 = vmatprep.subr.mxu0 0.0
    %450 = vmatpush1.msra.mxu0 0.0
    %451 = vmatprep.subr.mxu0 0.0
    %452 = vmatpush1.msra.mxu0 0.0
    %453 = vmatprep.subr.mxu0 0.0
    %454 = vmatpush1.msra.mxu0 0.0
    %455 = vmatprep.subr.mxu0 0.0
    %456 = vmatpush1.msra.mxu0 0.0
    %457 = vmatprep.subr.mxu0 0.0
    %458 = vmatpush1.msra.mxu0 0.0
    %459 = vmatprep.subr.mxu0 0.0
    %460 = vmatpush1.msra.mxu0 0.0
    %461 = vmatprep.subr.mxu0 0.0
    %462 = vmatpush1.msra.mxu0 0.0
    %463 = vmatprep.subr.mxu0 0.0
    %464 = vmatpush1.msra.mxu0 0.0
    %465 = vmatprep.subr.mxu0 0.0
    %466 = vmatpush1.msra.mxu0 0.0
    %467 = vmatprep.subr.mxu0 0.0
    %468 = vmatpush1.msra.mxu0 0.0
    %469 = vmatprep.subr.mxu0 0.0
    %470 = vmatpush1.msra.mxu0 0.0
    %471 = vmatprep.subr.mxu0 0.0
    %472 = vmatpush1.msra.mxu0 0.0
    %473 = vmatprep.subr.mxu0 0.0
    %474 = vmatpush1.msra.mxu0 0.0
    %475 = vmatprep.subr.mxu0 0.0
    %476 = vmatpush1.msra.mxu0 0.0
    %477 = vmatprep.subr.mxu0 0.0
    %478 = vmatpush1.msra.mxu0 0.0
    %479 = vmatprep.subr.mxu0 0.0
    %480 = vmatpush1.msra.mxu0 0.0
    %481 = vmatprep.subr.mxu0 0.0
    %482 = vmatpush1.msra.mxu0 0.0
    %483 = vmatprep.subr.mxu0 0.0
    %484 = vmatpush1.msra.mxu0 0.0
    %485 = vmatprep.subr.mxu0 0.0
    %486 = vmatpush1.msra.mxu0 0.0
    %487 = vmatprep.subr.mxu0 0.0
    %488 = vmatpush1.msra.mxu0 0.0
    %489 = vmatprep.subr.mxu0 0.0
    %490 = vmatpush1.msra.mxu0 0.0
    %491 = vmatprep.subr.mxu0 0.0
    %492 = vmatpush1.msra.mxu0 0.0
    %493 = vmatprep.subr.mxu0 0.0
    %494 = vmatpush1.msra.mxu0 0.0
    %495 = vmatprep.subr.mxu0 0.0
    %496 = vmatpush1.msra.mxu0 0.0
    %497 = vmatprep.subr.mxu0 0.0
    %498 = vmatpush1.msra.mxu0 0.0
    %499 = vmatprep.subr.mxu0 0.0
    %500 = vmatpush1.msra.mxu0 0.0
    %501 = vmatprep.mubr.f32.mxu0 0.0
    %502 = vmatmul.mubr.f32.gmra.mrb[0].mxu0 %v435
    %v503 = vpop.f32.mrb[0].mxu0
    %v504 = vadd.f32 0.0, %v503
    %v505 = vpop.f32.mrb[0].mxu0
    %506 = vdwg.mxu0
    %v507 = vadd.f32 %v433, %v504
    %v508 = vxor.u32 %v507, 2147483648
    %v509 = vmul.f32 %v508, 1.442695
    %v510 = vpow.pop %v509
    %v511 = vadd.f32 %v510, 1.0
    %v512 = vrcp.pop %v511
    %v513 = vmul.f32 1.0, %v512
    %v514 = vmul.f32 %v513, 2.0
    %v515 = vsub.f32 %v514, 1.0
    %517 = vrot.lane.b32.xlu0 %v422, 32
    %v518 = vpop.permute.xlu0 %517
    %v520 = vmul.f32 %v513, %v518
    %522 = vrot.lane.b32.xlu0 %v515, 64
    %v523 = vpop.permute.xlu0 %522
    %v525 = vmul.f32 %v513, %v523
    %527 = vrot.lane.b32.xlu0 %v525, 32
    %v528 = vpop.permute.xlu0 %527
    %v530 = vadd.f32 %v520, %v528
    %v531 = vtanh.pop %v530
    %533 = vrot.lane.b32.xlu0 %v531, 64
    %v534 = vpop.permute.xlu0 %533
    %v536 = vmul.f32 %v513, %v534
    %v537 = vsel %vm187, 2, 5
    %vm538 = vcmp.lt.s32.totalorder %v537, %v292
    %540 = vrot.lane.b32.xlu0 %v530, 96
    %v541 = vpop.permute.xlu0 %540
    %v543 = vsel %vm538, %v541, %v422
    %545 = vrot.lane.b32.xlu0 %v536, 32
    %v546 = vpop.permute.xlu0 %545
    %v548 = vsel %vm538, %v546, %v427
    %v549 = vsel %vm538, %v546, 0.0
    %550 = vst.msk [vmem:[#allocation3 + $0x2] sm:$0x1] %vm304, %v549
    %551 = vst.msk [vmem:[#allocation3 + $0x5] sm:$0x1] %vm306, %v549
    %552 = vst.msk [vmem:[#allocation3 + $0x9] sm:$0x2] %vm308, %v549
    %553 = vst.msk [vmem:[#allocation3 + $0xc] sm:$0x2] %vm310, %v549
    %v554 = vld [vmem:[#allocation2 + $0x6] sm:$0x3]
    %v556 = vsel %vm189, %v548, 0
    %558 = vmatprep.subr.mxu0 0.0
    %559 = vmatpush1.msra.mxu0 %v182
    %560 = vmatprep.subr.mxu0 0.0
    %561 = vmatpush1.msra.mxu0 %v183
    %562 = vmatprep.subr.mxu0 0.0
    %563 = vmatpush1.msra.mxu0 %v184
    %564 = vmatprep.subr.mxu0 0.0
    %565 = vmatpush1.msra.mxu0 %v185
    %566 = vmatprep.subr.mxu0 0.0
    %567 = vmatpush1.msra.mxu0 0.0
    %568 = vmatprep.subr.mxu0 0.0
    %569 = vmatpush1.msra.mxu0 0.0
    %570 = vmatprep.subr.mxu0 0.0
    %571 = vmatpush1.msra.mxu0 0.0
    %572 = vmatprep.subr.mxu0 0.0
    %573 = vmatpush1.msra.mxu0 0.0
    %574 = vmatprep.subr.mxu0 0.0
    %575 = vmatpush1.msra.mxu0 0.0
    %576 = vmatprep.subr.mxu0 0.0
    %577 = vmatpush1.msra.mxu0 0.0
    %578 = vmatprep.subr.mxu0 0.0
    %579 = vmatpush1.msra.mxu0 0.0
    %580 = vmatprep.subr.mxu0 0.0
    %581 = vmatpush1.msra.mxu0 0.0
    %582 = vmatprep.subr.mxu0 0.0
    %583 = vmatpush1.msra.mxu0 0.0
    %584 = vmatprep.subr.mxu0 0.0
    %585 = vmatpush1.msra.mxu0 0.0
    %586 = vmatprep.subr.mxu0 0.0
    %587 = vmatpush1.msra.mxu0 0.0
    %588 = vmatprep.subr.mxu0 0.0
    %589 = vmatpush1.msra.mxu0 0.0
    %590 = vmatprep.subr.mxu0 0.0
    %591 = vmatpush1.msra.mxu0 0.0
    %592 = vmatprep.subr.mxu0 0.0
    %593 = vmatpush1.msra.mxu0 0.0
    %594 = vmatprep.subr.mxu0 0.0
    %595 = vmatpush1.msra.mxu0 0.0
    %596 = vmatprep.subr.mxu0 0.0
    %597 = vmatpush1.msra.mxu0 0.0
    %598 = vmatprep.subr.mxu0 0.0
    %599 = vmatpush1.msra.mxu0 0.0
    %600 = vmatprep.subr.mxu0 0.0
    %601 = vmatpush1.msra.mxu0 0.0
    %602 = vmatprep.subr.mxu0 0.0
    %603 = vmatpush1.msra.mxu0 0.0
    %604 = vmatprep.subr.mxu0 0.0
    %605 = vmatpush1.msra.mxu0 0.0
    %606 = vmatprep.subr.mxu0 0.0
    %607 = vmatpush1.msra.mxu0 0.0
    %608 = vmatprep.subr.mxu0 0.0
    %609 = vmatpush1.msra.mxu0 0.0
    %610 = vmatprep.subr.mxu0 0.0
    %611 = vmatpush1.msra.mxu0 0.0
    %612 = vmatprep.subr.mxu0 0.0
    %613 = vmatpush1.msra.mxu0 0.0
    %614 = vmatprep.subr.mxu0 0.0
    %615 = vmatpush1.msra.mxu0 0.0
    %616 = vmatprep.subr.mxu0 0.0
    %617 = vmatpush1.msra.mxu0 0.0
    %618 = vmatprep.subr.mxu0 0.0
    %619 = vmatpush1.msra.mxu0 0.0
    %620 = vmatprep.subr.mxu0 0.0
    %621 = vmatpush1.msra.mxu0 0.0
    %622 = vmatprep.mubr.f32.mxu0 0.0
    %623 = vmatmul.mubr.f32.gmra.mrb[0].mxu0 %v556
    %v624 = vpop.f32.mrb[0].mxu0
    %v625 = vadd.f32 0.0, %v624
    %v626 = vpop.f32.mrb[0].mxu0
    %627 = vdwg.mxu0
    %v628 = vadd.f32 %v554, %v625
    %v629 = vxor.u32 %v628, 2147483648
    %v630 = vmul.f32 %v629, 1.442695
    %v631 = vpow.pop %v630
    %v632 = vadd.f32 %v631, 1.0
    %v633 = vrcp.pop %v632
    %v634 = vmul.f32 1.0, %v633
    %v635 = vmul.f32 %v634, 2.0
    %v636 = vsub.f32 %v635, 1.0
    %638 = vrot.lane.b32.xlu0 %v543, 32
    %v639 = vpop.permute.xlu0 %638
    %v641 = vmul.f32 %v634, %v639
    %643 = vrot.lane.b32.xlu0 %v636, 64
    %v644 = vpop.permute.xlu0 %643
    %v646 = vmul.f32 %v634, %v644
    %648 = vrot.lane.b32.xlu0 %v646, 32
    %v649 = vpop.permute.xlu0 %648
    %v651 = vadd.f32 %v641, %v649
    %v652 = vtanh.pop %v651
    %654 = vrot.lane.b32.xlu0 %v652, 64
    %v655 = vpop.permute.xlu0 %654
    %v657 = vmul.f32 %v634, %v655
    %v658 = vsel %vm187, 3, 4
    %vm659 = vcmp.lt.s32.totalorder %v658, %v292
    %661 = vrot.lane.b32.xlu0 %v651, 96
    %v662 = vpop.permute.xlu0 %661
    %v664 = vsel %vm659, %v662, %v543
    %666 = vrot.lane.b32.xlu0 %v657, 32
    %v667 = vpop.permute.xlu0 %666
    %v669 = vsel %vm659, %v667, %v548
    %v670 = vsel %vm659, %v667, 0.0
    %671 = vst.msk [vmem:[#allocation3 + $0x3] sm:$0x1] %vm304, %v670
    %672 = vst.msk [vmem:[#allocation3 + $0x4] sm:$0x1] %vm306, %v670
    %673 = vst.msk [vmem:[#allocation3 + $0xa] sm:$0x2] %vm308, %v670
    %674 = vst.msk [vmem:[#allocation3 + $0xb] sm:$0x2] %vm310, %v670
    %v675 = vld [vmem:[#allocation2 + $0x8] sm:$0x3]
    %v677 = vsel %vm189, %v669, 0
    %679 = vmatprep.subr.mxu0 0.0
    %680 = vmatpush1.msra.mxu0 %v182
    %681 = vmatprep.subr.mxu0 0.0
    %682 = vmatpush1.msra.mxu0 %v183
    %683 = vmatprep.subr.mxu0 0.0
    %684 = vmatpush1.msra.mxu0 %v184
    %685 = vmatprep.subr.mxu0 0.0
    %686 = vmatpush1.msra.mxu0 %v185
    %687 = vmatprep.subr.mxu0 0.0
    %688 = vmatpush1.msra.mxu0 0.0
    %689 = vmatprep.subr.mxu0 0.0
    %690 = vmatpush1.msra.mxu0 0.0
    %691 = vmatprep.subr.mxu0 0.0
    %692 = vmatpush1.msra.mxu0 0.0
    %693 = vmatprep.subr.mxu0 0.0
    %694 = vmatpush1.msra.mxu0 0.0
    %695 = vmatprep.subr.mxu0 0.0
    %696 = vmatpush1.msra.mxu0 0.0
    %697 = vmatprep.subr.mxu0 0.0
    %698 = vmatpush1.msra.mxu0 0.0
    %699 = vmatprep.subr.mxu0 0.0
    %700 = vmatpush1.msra.mxu0 0.0
    %701 = vmatprep.subr.mxu0 0.0
    %702 = vmatpush1.msra.mxu0 0.0
    %703 = vmatprep.subr.mxu0 0.0
    %704 = vmatpush1.msra.mxu0 0.0
    %705 = vmatprep.subr.mxu0 0.0
    %706 = vmatpush1.msra.mxu0 0.0
    %707 = vmatprep.subr.mxu0 0.0
    %708 = vmatpush1.msra.mxu0 0.0
    %709 = vmatprep.subr.mxu0 0.0
    %710 = vmatpush1.msra.mxu0 0.0
    %711 = vmatprep.subr.mxu0 0.0
    %712 = vmatpush1.msra.mxu0 0.0
    %713 = vmatprep.subr.mxu0 0.0
    %714 = vmatpush1.msra.mxu0 0.0
    %715 = vmatprep.subr.mxu0 0.0
    %716 = vmatpush1.msra.mxu0 0.0
    %717 = vmatprep.subr.mxu0 0.0
    %718 = vmatpush1.msra.mxu0 0.0
    %719 = vmatprep.subr.mxu0 0.0
    %720 = vmatpush1.msra.mxu0 0.0
    %721 = vmatprep.subr.mxu0 0.0
    %722 = vmatpush1.msra.mxu0 0.0
    %723 = vmatprep.subr.mxu0 0.0
    %724 = vmatpush1.msra.mxu0 0.0
    %725 = vmatprep.subr.mxu0 0.0
    %726 = vmatpush1.msra.mxu0 0.0
    %727 = vmatprep.subr.mxu0 0.0
    %728 = vmatpush1.msra.mxu0 0.0
    %729 = vmatprep.subr.mxu0 0.0
    %730 = vmatpush1.msra.mxu0 0.0
    %731 = vmatprep.subr.mxu0 0.0
    %732 = vmatpush1.msra.mxu0 0.0
    %733 = vmatprep.subr.mxu0 0.0
    %734 = vmatpush1.msra.mxu0 0.0
    %735 = vmatprep.subr.mxu0 0.0
    %736 = vmatpush1.msra.mxu0 0.0
    %737 = vmatprep.subr.mxu0 0.0
    %738 = vmatpush1.msra.mxu0 0.0
    %739 = vmatprep.subr.mxu0 0.0
    %740 = vmatpush1.msra.mxu0 0.0
    %741 = vmatprep.subr.mxu0 0.0
    %742 = vmatpush1.msra.mxu0 0.0
    %743 = vmatprep.mubr.f32.mxu0 0.0
    %744 = vmatmul.mubr.f32.gmra.mrb[0].mxu0 %v677
    %v745 = vpop.f32.mrb[0].mxu0
    %v746 = vadd.f32 0.0, %v745
    %v747 = vpop.f32.mrb[0].mxu0
    %748 = vdwg.mxu0
    %v749 = vadd.f32 %v675, %v746
    %v750 = vxor.u32 %v749, 2147483648
    %v751 = vmul.f32 %v750, 1.442695
    %v752 = vpow.pop %v751
    %v753 = vadd.f32 %v752, 1.0
    %v754 = vrcp.pop %v753
    %v755 = vmul.f32 1.0, %v754
    %v756 = vmul.f32 %v755, 2.0
    %v757 = vsub.f32 %v756, 1.0
    %759 = vrot.lane.b32.xlu0 %v664, 32
    %v760 = vpop.permute.xlu0 %759
    %v762 = vmul.f32 %v755, %v760
    %764 = vrot.lane.b32.xlu0 %v757, 64
    %v765 = vpop.permute.xlu0 %764
    %v767 = vmul.f32 %v755, %v765
    %769 = vrot.lane.b32.xlu0 %v767, 32
    %v770 = vpop.permute.xlu0 %769
    %v772 = vadd.f32 %v762, %v770
    %v773 = vtanh.pop %v772
    %775 = vrot.lane.b32.xlu0 %v773, 64
    %v776 = vpop.permute.xlu0 %775
    %v778 = vmul.f32 %v755, %v776
    %v779 = vsel %vm187, 4, 3
    %vm780 = vcmp.lt.s32.totalorder %v779, %v292
    %782 = vrot.lane.b32.xlu0 %v772, 96
    %v783 = vpop.permute.xlu0 %782
    %v785 = vsel %vm780, %v783, %v664
    %787 = vrot.lane.b32.xlu0 %v778, 32
    %v788 = vpop.permute.xlu0 %787
    %v790 = vsel %vm780, %v788, %v669
    %v791 = vsel %vm780, %v788, 0.0
    %792 = vst.msk [vmem:[#allocation3 + $0x4] sm:$0x1] %vm304, %v791
    %793 = vst.msk [vmem:[#allocation3 + $0x3] sm:$0x1] %vm306, %v791
    %794 = vst.msk [vmem:[#allocation3 + $0xb] sm:$0x2] %vm308, %v791
    %795 = vst.msk [vmem:[#allocation3 + $0xa] sm:$0x2] %vm310, %v791
    %v796 = vld [vmem:[#allocation2 + $0xa] sm:$0x3]
    %v798 = vsel %vm189, %v790, 0
    %800 = vmatprep.subr.mxu0 0.0
    %801 = vmatpush1.msra.mxu0 %v182
    %802 = vmatprep.subr.mxu0 0.0
    %803 = vmatpush1.msra.mxu0 %v183
    %804 = vmatprep.subr.mxu0 0.0
    %805 = vmatpush1.msra.mxu0 %v184
    %806 = vmatprep.subr.mxu0 0.0
    %807 = vmatpush1.msra.mxu0 %v185
    %808 = vmatprep.subr.mxu0 0.0
    %809 = vmatpush1.msra.mxu0 0.0
    %810 = vmatprep.subr.mxu0 0.0
    %811 = vmatpush1.msra.mxu0 0.0
    %812 = vmatprep.subr.mxu0 0.0
    %813 = vmatpush1.msra.mxu0 0.0
    %814 = vmatprep.subr.mxu0 0.0
    %815 = vmatpush1.msra.mxu0 0.0
    %816 = vmatprep.subr.mxu0 0.0
    %817 = vmatpush1.msra.mxu0 0.0
    %818 = vmatprep.subr.mxu0 0.0
    %819 = vmatpush1.msra.mxu0 0.0
    %820 = vmatprep.subr.mxu0 0.0
    %821 = vmatpush1.msra.mxu0 0.0
    %822 = vmatprep.subr.mxu0 0.0
    %823 = vmatpush1.msra.mxu0 0.0
    %824 = vmatprep.subr.mxu0 0.0
    %825 = vmatpush1.msra.mxu0 0.0
    %826 = vmatprep.subr.mxu0 0.0
    %827 = vmatpush1.msra.mxu0 0.0
    %828 = vmatprep.subr.mxu0 0.0
    %829 = vmatpush1.msra.mxu0 0.0
    %830 = vmatprep.subr.mxu0 0.0
    %831 = vmatpush1.msra.mxu0 0.0
    %832 = vmatprep.subr.mxu0 0.0
    %833 = vmatpush1.msra.mxu0 0.0
    %834 = vmatprep.subr.mxu0 0.0
    %835 = vmatpush1.msra.mxu0 0.0
    %836 = vmatprep.subr.mxu0 0.0
    %837 = vmatpush1.msra.mxu0 0.0
    %838 = vmatprep.subr.mxu0 0.0
    %839 = vmatpush1.msra.mxu0 0.0
    %840 = vmatprep.subr.mxu0 0.0
    %841 = vmatpush1.msra.mxu0 0.0
    %842 = vmatprep.subr.mxu0 0.0
    %843 = vmatpush1.msra.mxu0 0.0
    %844 = vmatprep.subr.mxu0 0.0
    %845 = vmatpush1.msra.mxu0 0.0
    %846 = vmatprep.subr.mxu0 0.0
    %847 = vmatpush1.msra.mxu0 0.0
    %848 = vmatprep.subr.mxu0 0.0
    %849 = vmatpush1.msra.mxu0 0.0
    %850 = vmatprep.subr.mxu0 0.0
    %851 = vmatpush1.msra.mxu0 0.0
    %852 = vmatprep.subr.mxu0 0.0
    %853 = vmatpush1.msra.mxu0 0.0
    %854 = vmatprep.subr.mxu0 0.0
    %855 = vmatpush1.msra.mxu0 0.0
    %856 = vmatprep.subr.mxu0 0.0
    %857 = vmatpush1.msra.mxu0 0.0
    %858 = vmatprep.subr.mxu0 0.0
    %859 = vmatpush1.msra.mxu0 0.0
    %860 = vmatprep.subr.mxu0 0.0
    %861 = vmatpush1.msra.mxu0 0.0
    %862 = vmatprep.subr.mxu0 0.0
    %863 = vmatpush1.msra.mxu0 0.0
    %864 = vmatprep.mubr.f32.mxu0 0.0
    %865 = vmatmul.mubr.f32.gmra.mrb[0].mxu0 %v798
    %v866 = vpop.f32.mrb[0].mxu0
    %v867 = vadd.f32 0.0, %v866
    %v868 = vpop.f32.mrb[0].mxu0
    %869 = vdwg.mxu0
    %v870 = vadd.f32 %v796, %v867
    %v871 = vxor.u32 %v870, 2147483648
    %v872 = vmul.f32 %v871, 1.442695
    %v873 = vpow.pop %v872
    %v874 = vadd.f32 %v873, 1.0
    %v875 = vrcp.pop %v874
    %v876 = vmul.f32 1.0, %v875
    %v877 = vmul.f32 %v876, 2.0
    %v878 = vsub.f32 %v877, 1.0
    %880 = vrot.lane.b32.xlu0 %v785, 32
    %v881 = vpop.permute.xlu0 %880
    %v883 = vmul.f32 %v876, %v881
    %885 = vrot.lane.b32.xlu0 %v878, 64
    %v886 = vpop.permute.xlu0 %885
    %v888 = vmul.f32 %v876, %v886
    %890 = vrot.lane.b32.xlu0 %v888, 32
    %v891 = vpop.permute.xlu0 %890
    %v893 = vadd.f32 %v883, %v891
    %v894 = vtanh.pop %v893
    %896 = vrot.lane.b32.xlu0 %v894, 64
    %v897 = vpop.permute.xlu0 %896
    %v899 = vmul.f32 %v876, %v897
    %v900 = vsel %vm187, 5, 2
    %vm901 = vcmp.lt.s32.totalorder %v900, %v292
    %903 = vrot.lane.b32.xlu0 %v893, 96
    %v904 = vpop.permute.xlu0 %903
    %v906 = vsel %vm901, %v904, %v785
    %908 = vrot.lane.b32.xlu0 %v899, 32
    %v909 = vpop.permute.xlu0 %908
    %v911 = vsel %vm901, %v909, %v790
    %v912 = vsel %vm901, %v909, 0.0
    %913 = vst.msk [vmem:[#allocation3 + $0x5] sm:$0x1] %vm304, %v912
    %914 = vst.msk [vmem:[#allocation3 + $0x2] sm:$0x1] %vm306, %v912
    %915 = vst.msk [vmem:[#allocation3 + $0xc] sm:$0x2] %vm308, %v912
    %916 = vst.msk [vmem:[#allocation3 + $0x9] sm:$0x2] %vm310, %v912
    %v917 = vld [vmem:[#allocation2 + $0xc] sm:$0x3]
    %v919 = vsel %vm189, %v911, 0
    %921 = vmatprep.subr.mxu0 0.0
    %922 = vmatpush1.msra.mxu0 %v182
    %923 = vmatprep.subr.mxu0 0.0
    %924 = vmatpush1.msra.mxu0 %v183
    %925 = vmatprep.subr.mxu0 0.0
    %926 = vmatpush1.msra.mxu0 %v184
    %927 = vmatprep.subr.mxu0 0.0
    %928 = vmatpush1.msra.mxu0 %v185
    %929 = vmatprep.subr.mxu0 0.0
    %930 = vmatpush1.msra.mxu0 0.0
    %931 = vmatprep.subr.mxu0 0.0
    %932 = vmatpush1.msra.mxu0 0.0
    %933 = vmatprep.subr.mxu0 0.0
    %934 = vmatpush1.msra.mxu0 0.0
    %935 = vmatprep.subr.mxu0 0.0
    %936 = vmatpush1.msra.mxu0 0.0
    %937 = vmatprep.subr.mxu0 0.0
    %938 = vmatpush1.msra.mxu0 0.0
    %939 = vmatprep.subr.mxu0 0.0
    %940 = vmatpush1.msra.mxu0 0.0
    %941 = vmatprep.subr.mxu0 0.0
    %942 = vmatpush1.msra.mxu0 0.0
    %943 = vmatprep.subr.mxu0 0.0
    %944 = vmatpush1.msra.mxu0 0.0
    %945 = vmatprep.subr.mxu0 0.0
    %946 = vmatpush1.msra.mxu0 0.0
    %947 = vmatprep.subr.mxu0 0.0
    %948 = vmatpush1.msra.mxu0 0.0
    %949 = vmatprep.subr.mxu0 0.0
    %950 = vmatpush1.msra.mxu0 0.0
    %951 = vmatprep.subr.mxu0 0.0
    %952 = vmatpush1.msra.mxu0 0.0
    %953 = vmatprep.subr.mxu0 0.0
    %954 = vmatpush1.msra.mxu0 0.0
    %955 = vmatprep.subr.mxu0 0.0
    %956 = vmatpush1.msra.mxu0 0.0
    %957 = vmatprep.subr.mxu0 0.0
    %958 = vmatpush1.msra.mxu0 0.0
    %959 = vmatprep.subr.mxu0 0.0
    %960 = vmatpush1.msra.mxu0 0.0
    %961 = vmatprep.subr.mxu0 0.0
    %962 = vmatpush1.msra.mxu0 0.0
    %963 = vmatprep.subr.mxu0 0.0
    %964 = vmatpush1.msra.mxu0 0.0
    %965 = vmatprep.subr.mxu0 0.0
    %966 = vmatpush1.msra.mxu0 0.0
    %967 = vmatprep.subr.mxu0 0.0
    %968 = vmatpush1.msra.mxu0 0.0
    %969 = vmatprep.subr.mxu0 0.0
    %970 = vmatpush1.msra.mxu0 0.0
    %971 = vmatprep.subr.mxu0 0.0
    %972 = vmatpush1.msra.mxu0 0.0
    %973 = vmatprep.subr.mxu0 0.0
    %974 = vmatpush1.msra.mxu0 0.0
    %975 = vmatprep.subr.mxu0 0.0
    %976 = vmatpush1.msra.mxu0 0.0
    %977 = vmatprep.subr.mxu0 0.0
    %978 = vmatpush1.msra.mxu0 0.0
    %979 = vmatprep.subr.mxu0 0.0
    %980 = vmatpush1.msra.mxu0 0.0
    %981 = vmatprep.subr.mxu0 0.0
    %982 = vmatpush1.msra.mxu0 0.0
    %983 = vmatprep.subr.mxu0 0.0
    %984 = vmatpush1.msra.mxu0 0.0
    %985 = vmatprep.mubr.f32.mxu0 0.0
    %986 = vmatmul.mubr.f32.gmra.mrb[0].mxu0 %v919
    %v987 = vpop.f32.mrb[0].mxu0
    %v988 = vadd.f32 0.0, %v987
    %v989 = vpop.f32.mrb[0].mxu0
    %990 = vdwg.mxu0
    %v991 = vadd.f32 %v917, %v988
    %v992 = vxor.u32 %v991, 2147483648
    %v993 = vmul.f32 %v992, 1.442695
    %v994 = vpow.pop %v993
    %v995 = vadd.f32 %v994, 1.0
    %v996 = vrcp.pop %v995
    %v997 = vmul.f32 1.0, %v996
    %v998 = vmul.f32 %v997, 2.0
    %v999 = vsub.f32 %v998, 1.0
    %1001 = vrot.lane.b32.xlu0 %v906, 32
    %v1002 = vpop.permute.xlu0 %1001
    %v1004 = vmul.f32 %v997, %v1002
    %1006 = vrot.lane.b32.xlu0 %v999, 64
    %v1007 = vpop.permute.xlu0 %1006
    %v1009 = vmul.f32 %v997, %v1007
    %1011 = vrot.lane.b32.xlu0 %v1009, 32
    %v1012 = vpop.permute.xlu0 %1011
    %v1014 = vadd.f32 %v1004, %v1012
    %v1015 = vtanh.pop %v1014
    %1017 = vrot.lane.b32.xlu0 %v1015, 64
    %v1018 = vpop.permute.xlu0 %1017
    %v1020 = vmul.f32 %v997, %v1018
    %v1021 = vsel %vm187, 6, 1
    %vm1022 = vcmp.lt.s32.totalorder %v1021, %v292
    %1024 = vrot.lane.b32.xlu0 %v1014, 96
    %v1025 = vpop.permute.xlu0 %1024
    %v1027 = vsel %vm1022, %v1025, %v906
    %1029 = vrot.lane.b32.xlu0 %v1020, 32
    %v1030 = vpop.permute.xlu0 %1029
    %v1032 = vsel %vm1022, %v1030, %v911
    %v1033 = vsel %vm1022, %v1030, 0.0
    %1034 = vst.msk [vmem:[#allocation3 + $0x6] sm:$0x1] %vm304, %v1033
    %1035 = vst.msk [vmem:[#allocation3 + $0x1] sm:$0x1] %vm306, %v1033
    %1036 = vst.msk [vmem:[#allocation3 + $0xd] sm:$0x2] %vm308, %v1033
    %1037 = vst.msk [vmem:[#allocation3 + $0x8] sm:$0x2] %vm310, %v1033
    %v1038 = vld [vmem:[#allocation2 + $0xe] sm:$0x3]
    %v1040 = vsel %vm189, %v1032, 0
    %1042 = vmatprep.subr.mxu0 0.0
    %1043 = vmatpush1.msra.mxu0 %v182
    %1044 = vmatprep.subr.mxu0 0.0
    %1045 = vmatpush1.msra.mxu0 %v183
    %1046 = vmatprep.subr.mxu0 0.0
    %1047 = vmatpush1.msra.mxu0 %v184
    %1048 = vmatprep.subr.mxu0 0.0
    %1049 = vmatpush1.msra.mxu0 %v185
    %1050 = vmatprep.subr.mxu0 0.0
    %1051 = vmatpush1.msra.mxu0 0.0
    %1052 = vmatprep.subr.mxu0 0.0
    %1053 = vmatpush1.msra.mxu0 0.0
    %1054 = vmatprep.subr.mxu0 0.0
    %1055 = vmatpush1.msra.mxu0 0.0
    %1056 = vmatprep.subr.mxu0 0.0
    %1057 = vmatpush1.msra.mxu0 0.0
    %1058 = vmatprep.subr.mxu0 0.0
    %1059 = vmatpush1.msra.mxu0 0.0
    %1060 = vmatprep.subr.mxu0 0.0
    %1061 = vmatpush1.msra.mxu0 0.0
    %1062 = vmatprep.subr.mxu0 0.0
    %1063 = vmatpush1.msra.mxu0 0.0
    %1064 = vmatprep.subr.mxu0 0.0
    %1065 = vmatpush1.msra.mxu0 0.0
    %1066 = vmatprep.subr.mxu0 0.0
    %1067 = vmatpush1.msra.mxu0 0.0
    %1068 = vmatprep.subr.mxu0 0.0
    %1069 = vmatpush1.msra.mxu0 0.0
    %1070 = vmatprep.subr.mxu0 0.0
    %1071 = vmatpush1.msra.mxu0 0.0
    %1072 = vmatprep.subr.mxu0 0.0
    %1073 = vmatpush1.msra.mxu0 0.0
    %1074 = vmatprep.subr.mxu0 0.0
    %1075 = vmatpush1.msra.mxu0 0.0
    %1076 = vmatprep.subr.mxu0 0.0
    %1077 = vmatpush1.msra.mxu0 0.0
    %1078 = vmatprep.subr.mxu0 0.0
    %1079 = vmatpush1.msra.mxu0 0.0
    %1080 = vmatprep.subr.mxu0 0.0
    %1081 = vmatpush1.msra.mxu0 0.0
    %1082 = vmatprep.subr.mxu0 0.0
    %1083 = vmatpush1.msra.mxu0 0.0
    %1084 = vmatprep.subr.mxu0 0.0
    %1085 = vmatpush1.msra.mxu0 0.0
    %1086 = vmatprep.subr.mxu0 0.0
    %1087 = vmatpush1.msra.mxu0 0.0
    %1088 = vmatprep.subr.mxu0 0.0
    %1089 = vmatpush1.msra.mxu0 0.0
    %1090 = vmatprep.subr.mxu0 0.0
    %1091 = vmatpush1.msra.mxu0 0.0
    %1092 = vmatprep.subr.mxu0 0.0
    %1093 = vmatpush1.msra.mxu0 0.0
    %1094 = vmatprep.subr.mxu0 0.0
    %1095 = vmatpush1.msra.mxu0 0.0
    %1096 = vmatprep.subr.mxu0 0.0
    %1097 = vmatpush1.msra.mxu0 0.0
    %1098 = vmatprep.subr.mxu0 0.0
    %1099 = vmatpush1.msra.mxu0 0.0
    %1100 = vmatprep.subr.mxu0 0.0
    %1101 = vmatpush1.msra.mxu0 0.0
    %1102 = vmatprep.subr.mxu0 0.0
    %1103 = vmatpush1.msra.mxu0 0.0
    %1104 = vmatprep.subr.mxu0 0.0
    %1105 = vmatpush1.msra.mxu0 0.0
    %1106 = vmatprep.mubr.f32.mxu0 0.0
    %1107 = vmatmul.mubr.f32.gmra.mrb[0].mxu0 %v1040
    %v1108 = vpop.f32.mrb[0].mxu0
    %v1109 = vadd.f32 0.0, %v1108
    %v1110 = vpop.f32.mrb[0].mxu0
    %1111 = vdwg.mxu0
    %v1112 = vadd.f32 %v1038, %v1109
    %v1113 = vxor.u32 %v1112, 2147483648
    %v1114 = vmul.f32 %v1113, 1.442695
    %v1115 = vpow.pop %v1114
    %v1116 = vadd.f32 %v1115, 1.0
    %v1117 = vrcp.pop %v1116
    %v1118 = vmul.f32 1.0, %v1117
    %v1119 = vmul.f32 %v1118, 2.0
    %v1120 = vsub.f32 %v1119, 1.0
    %1122 = vrot.lane.b32.xlu0 %v1027, 32
    %v1123 = vpop.permute.xlu0 %1122
    %v1125 = vmul.f32 %v1118, %v1123
    %1127 = vrot.lane.b32.xlu0 %v1120, 64
    %v1128 = vpop.permute.xlu0 %1127
    %v1130 = vmul.f32 %v1118, %v1128
    %1132 = vrot.lane.b32.xlu0 %v1130, 32
    %v1133 = vpop.permute.xlu0 %1132
    %v1135 = vadd.f32 %v1125, %v1133
    %v1136 = vtanh.pop %v1135
    %1138 = vrot.lane.b32.xlu0 %v1136, 64
    %v1139 = vpop.permute.xlu0 %1138
    %v1141 = vmul.f32 %v1118, %v1139
    %v1142 = vsel %vm187, 7, 0
    %vm1143 = vcmp.lt.s32.totalorder %v1142, %v292
    %1145 = vrot.lane.b32.xlu0 %v1141, 32
    %v1146 = vpop.permute.xlu0 %1145
    %v1148 = vsel %vm1143, %v1146, 0.0
    %1149 = vst.msk [vmem:[#allocation3 + $0x7] sm:$0x1] %vm304, %v1148
    %1150 = vst.msk [vmem:[#allocation3] sm:$0x1] %vm306, %v1148
    %1151 = vst.msk [vmem:[#allocation3 + $0xe] sm:$0x2] %vm308, %v1148
    %1152 = vst.msk [vmem:[#allocation3 + $0x7] sm:$0x2] %vm310, %v1148
    %v1153 = vld [vmem:[#allocation3] sm:$0xff]
    %v1154 = vld [vmem:[#allocation3 + $0x8] sm:$0xff]
    %v1155 = vld [vmem:[%s7] sm:$0xff]
    %v1156 = vld [vmem:[%s7 + $0x8] sm:$0xff]
    %v1157 = vld [vmem:[%s7 + $0x10] sm:$0xff]
    %v1158 = vld [vmem:[%s7 + $0x18] sm:$0xff]
    %v1159 = vld [vmem:[%s8] sm:$0x1]
    %v1161 = vlaneseq
    %v1162 = vshrl.u32 %v1161, 7
    %v1163 = vsub.s32 0, %v1162
    %v1164 = vrot.slane %v1159, %v1163
    %v1167 = vsel %vm189, %v1153, 0
    %v1170 = vsel %vm189, %v1154, 0
    %1172 = vmatprep.subr.mxu0 0.0
    %1173 = vmatpush1.msra.mxu0 %v1155
    %1174 = vmatprep.subr.mxu0 0.0
    %1175 = vmatpush1.msra.mxu0 %v1156
    %1176 = vmatprep.subr.mxu0 0.0
    %1177 = vmatpush1.msra.mxu0 %v1157
    %1178 = vmatprep.subr.mxu0 0.0
    %1179 = vmatpush1.msra.mxu0 %v1158
    %1180 = vmatprep.subr.mxu0 0.0
    %1181 = vmatpush1.msra.mxu0 0.0
    %1182 = vmatprep.subr.mxu0 0.0
    %1183 = vmatpush1.msra.mxu0 0.0
    %1184 = vmatprep.subr.mxu0 0.0
    %1185 = vmatpush1.msra.mxu0 0.0
    %1186 = vmatprep.subr.mxu0 0.0
    %1187 = vmatpush1.msra.mxu0 0.0
    %1188 = vmatprep.subr.mxu0 0.0
    %1189 = vmatpush1.msra.mxu0 0.0
    %1190 = vmatprep.subr.mxu0 0.0
    %1191 = vmatpush1.msra.mxu0 0.0
    %1192 = vmatprep.subr.mxu0 0.0
    %1193 = vmatpush1.msra.mxu0 0.0
    %1194 = vmatprep.subr.mxu0 0.0
    %1195 = vmatpush1.msra.mxu0 0.0
    %1196 = vmatprep.subr.mxu0 0.0
    %1197 = vmatpush1.msra.mxu0 0.0
    %1198 = vmatprep.subr.mxu0 0.0
    %1199 = vmatpush1.msra.mxu0 0.0
    %1200 = vmatprep.subr.mxu0 0.0
    %1201 = vmatpush1.msra.mxu0 0.0
    %1202 = vmatprep.subr.mxu0 0.0
    %1203 = vmatpush1.msra.mxu0 0.0
    %1204 = vmatprep.subr.mxu0 0.0
    %1205 = vmatpush1.msra.mxu0 0.0
    %1206 = vmatprep.subr.mxu0 0.0
    %1207 = vmatpush1.msra.mxu0 0.0
    %1208 = vmatprep.subr.mxu0 0.0
    %1209 = vmatpush1.msra.mxu0 0.0
    %1210 = vmatprep.subr.mxu0 0.0
    %1211 = vmatpush1.msra.mxu0 0.0
    %1212 = vmatprep.subr.mxu0 0.0
    %1213 = vmatpush1.msra.mxu0 0.0
    %1214 = vmatprep.subr.mxu0 0.0
    %1215 = vmatpush1.msra.mxu0 0.0
    %1216 = vmatprep.subr.mxu0 0.0
    %1217 = vmatpush1.msra.mxu0 0.0
    %1218 = vmatprep.subr.mxu0 0.0
    %1219 = vmatpush1.msra.mxu0 0.0
    %1220 = vmatprep.subr.mxu0 0.0
    %1221 = vmatpush1.msra.mxu0 0.0
    %1222 = vmatprep.subr.mxu0 0.0
    %1223 = vmatpush1.msra.mxu0 0.0
    %1224 = vmatprep.subr.mxu0 0.0
    %1225 = vmatpush1.msra.mxu0 0.0
    %1226 = vmatprep.subr.mxu0 0.0
    %1227 = vmatpush1.msra.mxu0 0.0
    %1228 = vmatprep.subr.mxu0 0.0
    %1229 = vmatpush1.msra.mxu0 0.0
    %1230 = vmatprep.subr.mxu0 0.0
    %1231 = vmatpush1.msra.mxu0 0.0
    %1232 = vmatprep.subr.mxu0 0.0
    %1233 = vmatpush1.msra.mxu0 0.0
    %1234 = vmatprep.subr.mxu0 0.0
    %1235 = vmatpush1.msra.mxu0 0.0
    %1236 = vmatprep.mubr.f32.mxu0 0.0
    %1237 = vmatmul.mubr.f32.gmra.mrb[0].mxu0 %v1167
    %v1238 = vpop.f32.mrb[0].mxu0
    %v1239 = vadd.f32 %v1164, %v1238
    %v1240 = vpop.f32.mrb[0].mxu0
    %1241 = vmatprep.mubr.f32.mxu0 0.0
    %1242 = vmatmul.mubr.f32.gmra.mrb[0].mxu0 %v1170
    %v1243 = vpop.f32.mrb[0].mxu0
    %v1244 = vadd.f32 %v1164, %v1243
    %v1245 = vpop.f32.mrb[0].mxu0
    %1246 = vdwg.mxu0
    %v1247 = vmax.f32 %v1239, 0.0
    %v1248 = vmax.f32 %v1244, 0.0
    %v1249 = vld [vmem:[%s9] sm:$0xff]
    %v1250 = vld [vmem:[%s9 + $0x8] sm:$0xff]
    %v1251 = vld [vmem:[%s10] sm:$0x1]
    %v1253 = vlaneseq
    %v1254 = vshrl.u32 %v1253, 7
    %v1255 = vsub.s32 0, %v1254
    %v1256 = vrot.slane %v1251, %v1255
    %vm1258 = vcmask 130048
    %v1260 = vsel %vm1258, %v1247, 0
    %v1263 = vsel %vm1258, %v1248, 0
    %1265 = vmatprep.subr.mxu0 0.0
    %1266 = vmatpush1.msra.mxu0 %v1249
    %1267 = vmatprep.subr.mxu0 0.0
    %1268 = vmatpush1.msra.mxu0 %v1250
    %1269 = vmatprep.subr.mxu0 0.0
    %1270 = vmatpush1.msra.mxu0 0.0
    %1271 = vmatprep.subr.mxu0 0.0
    %1272 = vmatpush1.msra.mxu0 0.0
    %1273 = vmatprep.subr.mxu0 0.0
    %1274 = vmatpush1.msra.mxu0 0.0
    %1275 = vmatprep.subr.mxu0 0.0
    %1276 = vmatpush1.msra.mxu0 0.0
    %1277 = vmatprep.subr.mxu0 0.0
    %1278 = vmatpush1.msra.mxu0 0.0
    %1279 = vmatprep.subr.mxu0 0.0
    %1280 = vmatpush1.msra.mxu0 0.0
    %1281 = vmatprep.subr.mxu0 0.0
    %1282 = vmatpush1.msra.mxu0 0.0
    %1283 = vmatprep.subr.mxu0 0.0
    %1284 = vmatpush1.msra.mxu0 0.0
    %1285 = vmatprep.subr.mxu0 0.0
    %1286 = vmatpush1.msra.mxu0 0.0
    %1287 = vmatprep.subr.mxu0 0.0
    %1288 = vmatpush1.msra.mxu0 0.0
    %1289 = vmatprep.subr.mxu0 0.0
    %1290 = vmatpush1.msra.mxu0 0.0
    %1291 = vmatprep.subr.mxu0 0.0
    %1292 = vmatpush1.msra.mxu0 0.0
    %1293 = vmatprep.subr.mxu0 0.0
    %1294 = vmatpush1.msra.mxu0 0.0
    %1295 = vmatprep.subr.mxu0 0.0
    %1296 = vmatpush1.msra.mxu0 0.0
    %1297 = vmatprep.subr.mxu0 0.0
    %1298 = vmatpush1.msra.mxu0 0.0
    %1299 = vmatprep.subr.mxu0 0.0
    %1300 = vmatpush1.msra.mxu0 0.0
    %1301 = vmatprep.subr.mxu0 0.0
    %1302 = vmatpush1.msra.mxu0 0.0
    %1303 = vmatprep.subr.mxu0 0.0
    %1304 = vmatpush1.msra.mxu0 0.0
    %1305 = vmatprep.subr.mxu0 0.0
    %1306 = vmatpush1.msra.mxu0 0.0
    %1307 = vmatprep.subr.mxu0 0.0
    %1308 = vmatpush1.msra.mxu0 0.0
    %1309 = vmatprep.subr.mxu0 0.0
    %1310 = vmatpush1.msra.mxu0 0.0
    %1311 = vmatprep.subr.mxu0 0.0
    %1312 = vmatpush1.msra.mxu0 0.0
    %1313 = vmatprep.subr.mxu0 0.0
    %1314 = vmatpush1.msra.mxu0 0.0
    %1315 = vmatprep.subr.mxu0 0.0
    %1316 = vmatpush1.msra.mxu0 0.0
    %1317 = vmatprep.subr.mxu0 0.0
    %1318 = vmatpush1.msra.mxu0 0.0
    %1319 = vmatprep.subr.mxu0 0.0
    %1320 = vmatpush1.msra.mxu0 0.0
    %1321 = vmatprep.subr.mxu0 0.0
    %1322 = vmatpush1.msra.mxu0 0.0
    %1323 = vmatprep.subr.mxu0 0.0
    %1324 = vmatpush1.msra.mxu0 0.0
    %1325 = vmatprep.subr.mxu0 0.0
    %1326 = vmatpush1.msra.mxu0 0.0
    %1327 = vmatprep.subr.mxu0 0.0
    %1328 = vmatpush1.msra.mxu0 0.0
    %1329 = vmatprep.mubr.f32.mxu0 0.0
    %1330 = vmatmul.mubr.f32.gmra.mrb[0].mxu0 %v1260
    %v1331 = vpop.f32.mrb[0].mxu0
    %v1332 = vadd.f32 %v1256, %v1331
    %v1333 = vpop.f32.mrb[0].mxu0
    %1334 = vmatprep.mubr.f32.mxu0 0.0
    %1335 = vmatmul.mubr.f32.gmra.mrb[0].mxu0 %v1263
    %v1336 = vpop.f32.mrb[0].mxu0
    %v1337 = vadd.f32 %v1256, %v1336
    %v1338 = vpop.f32.mrb[0].mxu0
    %1339 = vdwg.mxu0
    %v1340 = vlaneseq
    %v1341 = vshrl.u32 %v1340, 7
    %v1342 = vld [vmem:[#allocation3] sm:$0xff]
    %s1343 = sld [smem:[#allocation4]]
    %v1344 = vstv %s1343
    %vm1345 = vcmp.lt.s32.totalorder %v1341, %v1344
    %v1346 = vsel %vm1345, 1, 0
    %vm1347 = vcmp.eq.s32.totalorder %v1346, 1
    %v1348 = vsel %vm1347, %v1332, -1e+30
    %vm1349 = vcmask 15360
    %v1350 = vsel %vm1349, %v1348, -inf
    %v1351 = vrot.slane %v1350, 4
    %v1352 = vmax.f32 %v1350, %v1351
    %v1353 = vrot.slane %v1352, 2
    %v1354 = vmax.f32 %v1352, %v1353
    %v1355 = vrot.slane %v1354, 1
    %v1356 = vmax.f32 %v1354, %v1355
    %v1357 = vsub.f32 %v1348, %v1356
    %v1358 = vmul.f32 %v1357, 1.442695
    %v1359 = vpow.pop %v1358
    %v1360 = vsel %vm1347, %v1359, 0.0
    %v1361 = vsel %vm1349, %v1360, 0.0
    %v1362 = vrot.slane %v1361, 4
    %v1363 = vadd.f32 %v1361, %v1362
    %v1364 = vrot.slane %v1363, 2
    %v1365 = vadd.f32 %v1363, %v1364
    %v1366 = vrot.slane %v1365, 1
    %v1367 = vadd.f32 %v1365, %v1366
    %v1368 = vrcp.pop %v1367
    %v1369 = vmul.f32 %v1360, %v1368
    %1370 = vxpose.xlu0.b32.start [1/16] %v1369, 128
    %1371 = vxpose.xlu0.b32.cont [2/16] 0.0, 128
    %1372 = vxpose.xlu0.b32.cont [3/16] 0.0, 128
    %1373 = vxpose.xlu0.b32.cont [4/16] 0.0, 128
    %1374 = vxpose.xlu0.b32.cont [5/16] 0.0, 128
    %1375 = vxpose.xlu0.b32.cont [6/16] 0.0, 128
    %1376 = vxpose.xlu0.b32.cont [7/16] 0.0, 128
    %1377 = vxpose.xlu0.b32.cont [8/16] 0.0, 128
    %1378 = vxpose.xlu0.b32.cont [9/16] 0.0, 128
    %1379 = vxpose.xlu0.b32.cont [10/16] 0.0, 128
    %1380 = vxpose.xlu0.b32.cont [11/16] 0.0, 128
    %1381 = vxpose.xlu0.b32.cont [12/16] 0.0, 128
    %1382 = vxpose.xlu0.b32.cont [13/16] 0.0, 128
    %1383 = vxpose.xlu0.b32.cont [14/16] 0.0, 128
    %1384 = vxpose.xlu0.b32.cont [15/16] 0.0, 128
    %1385 = vxpose.xlu0.b32.end [16/16] 0.0, 128
    %v1386 = vpop.trf.xlu0
    %v1387 = vpop.trf.xlu0
    %v1388 = vpop.trf.xlu0
    %v1389 = vpop.trf.xlu0
    %v1390 = vpop.trf.xlu0
    %v1391 = vpop.trf.xlu0
    %v1392 = vpop.trf.xlu0
    %v1393 = vpop.trf.xlu0
    %v1394 = vpop.trf.xlu0
    %v1395 = vpop.trf.xlu0
    %v1396 = vpop.trf.xlu0
    %v1397 = vpop.trf.xlu0
    %v1398 = vpop.trf.xlu0
    %v1399 = vpop.trf.xlu0
    %v1400 = vpop.trf.xlu0
    %v1401 = vpop.trf.xlu0
    %vm1402 = vcmask 64512
    %v1404 = vsel %vm1402, %v1386, 0
    %1406 = vmatprep.subr.mxu0 0.0
    %1407 = vmatpush1.msra.mxu0 %v1342
    %1408 = vmatprep.subr.mxu0 0.0
    %1409 = vmatpush1.msra.mxu0 0.0
    %1410 = vmatprep.subr.mxu0 0.0
    %1411 = vmatpush1.msra.mxu0 0.0
    %1412 = vmatprep.subr.mxu0 0.0
    %1413 = vmatpush1.msra.mxu0 0.0
    %1414 = vmatprep.subr.mxu0 0.0
    %1415 = vmatpush1.msra.mxu0 0.0
    %1416 = vmatprep.subr.mxu0 0.0
    %1417 = vmatpush1.msra.mxu0 0.0
    %1418 = vmatprep.subr.mxu0 0.0
    %1419 = vmatpush1.msra.mxu0 0.0
    %1420 = vmatprep.subr.mxu0 0.0
    %1421 = vmatpush1.msra.mxu0 0.0
    %1422 = vmatprep.subr.mxu0 0.0
    %1423 = vmatpush1.msra.mxu0 0.0
    %1424 = vmatprep.subr.mxu0 0.0
    %1425 = vmatpush1.msra.mxu0 0.0
    %1426 = vmatprep.subr.mxu0 0.0
    %1427 = vmatpush1.msra.mxu0 0.0
    %1428 = vmatprep.subr.mxu0 0.0
    %1429 = vmatpush1.msra.mxu0 0.0
    %1430 = vmatprep.subr.mxu0 0.0
    %1431 = vmatpush1.msra.mxu0 0.0
    %1432 = vmatprep.subr.mxu0 0.0
    %1433 = vmatpush1.msra.mxu0 0.0
    %1434 = vmatprep.subr.mxu0 0.0
    %1435 = vmatpush1.msra.mxu0 0.0
    %1436 = vmatprep.subr.mxu0 0.0
    %1437 = vmatpush1.msra.mxu0 0.0
    %1438 = vmatprep.subr.mxu0 0.0
    %1439 = vmatpush1.msra.mxu0 0.0
    %1440 = vmatprep.subr.mxu0 0.0
    %1441 = vmatpush1.msra.mxu0 0.0
    %1442 = vmatprep.subr.mxu0 0.0
    %1443 = vmatpush1.msra.mxu0 0.0
    %1444 = vmatprep.subr.mxu0 0.0
    %1445 = vmatpush1.msra.mxu0 0.0
    %1446 = vmatprep.subr.mxu0 0.0
    %1447 = vmatpush1.msra.mxu0 0.0
    %1448 = vmatprep.subr.mxu0 0.0
    %1449 = vmatpush1.msra.mxu0 0.0
    %1450 = vmatprep.subr.mxu0 0.0
    %1451 = vmatpush1.msra.mxu0 0.0
    %1452 = vmatprep.subr.mxu0 0.0
    %1453 = vmatpush1.msra.mxu0 0.0
    %1454 = vmatprep.subr.mxu0 0.0
    %1455 = vmatpush1.msra.mxu0 0.0
    %1456 = vmatprep.subr.mxu0 0.0
    %1457 = vmatpush1.msra.mxu0 0.0
    %1458 = vmatprep.subr.mxu0 0.0
    %1459 = vmatpush1.msra.mxu0 0.0
    %1460 = vmatprep.subr.mxu0 0.0
    %1461 = vmatpush1.msra.mxu0 0.0
    %1462 = vmatprep.subr.mxu0 0.0
    %1463 = vmatpush1.msra.mxu0 0.0
    %1464 = vmatprep.subr.mxu0 0.0
    %1465 = vmatpush1.msra.mxu0 0.0
    %1466 = vmatprep.subr.mxu0 0.0
    %1467 = vmatpush1.msra.mxu0 0.0
    %1468 = vmatprep.subr.mxu0 0.0
    %1469 = vmatpush1.msra.mxu0 0.0
    %1470 = vmatprep.mubr.f32.mxu0 0.0
    %1471 = vmatmul.mubr.f32.gmra.mrb[0].mxu0 %v1404
    %v1472 = vpop.f32.mrb[0].mxu0
    %v1473 = vadd.f32 0.0, %v1472
    %v1474 = vpop.f32.mrb[0].mxu0
    %1475 = vdwg.mxu0
    %v1477 = vrot.slane %v1473, 1
    %1478 = vrot.lane.b32.xlu0 %v1477, 32
    %v1479 = vpop.permute.xlu0 %1478
    %v1481 = vsel %vm189, %v1473, %v1479
    %s1482 = sld [smem:[#allocation4 + $0x1]]
    %v1483 = vstv %s1482
    %vm1484 = vcmp.lt.s32.totalorder %v1341, %v1483
    %v1485 = vsel %vm1484, 1, 0
    %vm1486 = vcmp.eq.s32.totalorder %v1485, 1
    %v1487 = vsel %vm1486, %v1337, -1e+30
    %v1488 = vsel %vm1349, %v1487, -inf
    %v1489 = vrot.slane %v1488, 4
    %v1490 = vmax.f32 %v1488, %v1489
    %v1491 = vrot.slane %v1490, 2
    %v1492 = vmax.f32 %v1490, %v1491
    %v1493 = vrot.slane %v1492, 1
    %v1494 = vmax.f32 %v1492, %v1493
    %v1495 = vsub.f32 %v1487, %v1494
    %v1496 = vmul.f32 %v1495, 1.442695
    %v1497 = vpow.pop %v1496
    %v1498 = vsel %vm1486, %v1497, 0.0
    %v1499 = vsel %vm1349, %v1498, 0.0
    %v1500 = vrot.slane %v1499, 4
    %v1501 = vadd.f32 %v1499, %v1500
    %v1502 = vrot.slane %v1501, 2
    %v1503 = vadd.f32 %v1501, %v1502
    %v1504 = vrot.slane %v1503, 1
    %v1505 = vadd.f32 %v1503, %v1504
    %v1506 = vrcp.pop %v1505
    %v1507 = vmul.f32 %v1498, %v1506
    %1508 = vxpose.xlu0.b32.start [1/16] %v1507, 128
    %1509 = vxpose.xlu0.b32.cont [2/16] 0.0, 128
    %1510 = vxpose.xlu0.b32.cont [3/16] 0.0, 128
    %1511 = vxpose.xlu0.b32.cont [4/16] 0.0, 128
    %1512 = vxpose.xlu0.b32.cont [5/16] 0.0, 128
    %1513 = vxpose.xlu0.b32.cont [6/16] 0.0, 128
    %1514 = vxpose.xlu0.b32.cont [7/16] 0.0, 128
    %1515 = vxpose.xlu0.b32.cont [8/16] 0.0, 128
    %1516 = vxpose.xlu0.b32.cont [9/16] 0.0, 128
    %1517 = vxpose.xlu0.b32.cont [10/16] 0.0, 128
    %1518 = vxpose.xlu0.b32.cont [11/16] 0.0, 128
    %1519 = vxpose.xlu0.b32.cont [12/16] 0.0, 128
    %1520 = vxpose.xlu0.b32.cont [13/16] 0.0, 128
    %1521 = vxpose.xlu0.b32.cont [14/16] 0.0, 128
    %1522 = vxpose.xlu0.b32.cont [15/16] 0.0, 128
    %1523 = vxpose.xlu0.b32.end [16/16] 0.0, 128
    %v1524 = vpop.trf.xlu0
    %v1525 = vpop.trf.xlu0
    %v1526 = vpop.trf.xlu0
    %v1527 = vpop.trf.xlu0
    %v1528 = vpop.trf.xlu0
    %v1529 = vpop.trf.xlu0
    %v1530 = vpop.trf.xlu0
    %v1531 = vpop.trf.xlu0
    %v1532 = vpop.trf.xlu0
    %v1533 = vpop.trf.xlu0
    %v1534 = vpop.trf.xlu0
    %v1535 = vpop.trf.xlu0
    %v1536 = vpop.trf.xlu0
    %v1537 = vpop.trf.xlu0
    %v1538 = vpop.trf.xlu0
    %v1539 = vpop.trf.xlu0
    %v1541 = vsel %vm1402, %v1524, 0
    %1543 = vmatprep.subr.mxu0 0.0
    %1544 = vmatpush1.msra.mxu0 %v1154
    %1545 = vmatprep.subr.mxu0 0.0
    %1546 = vmatpush1.msra.mxu0 0.0
    %1547 = vmatprep.subr.mxu0 0.0
    %1548 = vmatpush1.msra.mxu0 0.0
    %1549 = vmatprep.subr.mxu0 0.0
    %1550 = vmatpush1.msra.mxu0 0.0
    %1551 = vmatprep.subr.mxu0 0.0
    %1552 = vmatpush1.msra.mxu0 0.0
    %1553 = vmatprep.subr.mxu0 0.0
    %1554 = vmatpush1.msra.mxu0 0.0
    %1555 = vmatprep.subr.mxu0 0.0
    %1556 = vmatpush1.msra.mxu0 0.0
    %1557 = vmatprep.subr.mxu0 0.0
    %1558 = vmatpush1.msra.mxu0 0.0
    %1559 = vmatprep.subr.mxu0 0.0
    %1560 = vmatpush1.msra.mxu0 0.0
    %1561 = vmatprep.subr.mxu0 0.0
    %1562 = vmatpush1.msra.mxu0 0.0
    %1563 = vmatprep.subr.mxu0 0.0
    %1564 = vmatpush1.msra.mxu0 0.0
    %1565 = vmatprep.subr.mxu0 0.0
    %1566 = vmatpush1.msra.mxu0 0.0
    %1567 = vmatprep.subr.mxu0 0.0
    %1568 = vmatpush1.msra.mxu0 0.0
    %1569 = vmatprep.subr.mxu0 0.0
    %1570 = vmatpush1.msra.mxu0 0.0
    %1571 = vmatprep.subr.mxu0 0.0
    %1572 = vmatpush1.msra.mxu0 0.0
    %1573 = vmatprep.subr.mxu0 0.0
    %1574 = vmatpush1.msra.mxu0 0.0
    %1575 = vmatprep.subr.mxu0 0.0
    %1576 = vmatpush1.msra.mxu0 0.0
    %1577 = vmatprep.subr.mxu0 0.0
    %1578 = vmatpush1.msra.mxu0 0.0
    %1579 = vmatprep.subr.mxu0 0.0
    %1580 = vmatpush1.msra.mxu0 0.0
    %1581 = vmatprep.subr.mxu0 0.0
    %1582 = vmatpush1.msra.mxu0 0.0
    %1583 = vmatprep.subr.mxu0 0.0
    %1584 = vmatpush1.msra.mxu0 0.0
    %1585 = vmatprep.subr.mxu0 0.0
    %1586 = vmatpush1.msra.mxu0 0.0
    %1587 = vmatprep.subr.mxu0 0.0
    %1588 = vmatpush1.msra.mxu0 0.0
    %1589 = vmatprep.subr.mxu0 0.0
    %1590 = vmatpush1.msra.mxu0 0.0
    %1591 = vmatprep.subr.mxu0 0.0
    %1592 = vmatpush1.msra.mxu0 0.0
    %1593 = vmatprep.subr.mxu0 0.0
    %1594 = vmatpush1.msra.mxu0 0.0
    %1595 = vmatprep.subr.mxu0 0.0
    %1596 = vmatpush1.msra.mxu0 0.0
    %1597 = vmatprep.subr.mxu0 0.0
    %1598 = vmatpush1.msra.mxu0 0.0
    %1599 = vmatprep.subr.mxu0 0.0
    %1600 = vmatpush1.msra.mxu0 0.0
    %1601 = vmatprep.subr.mxu0 0.0
    %1602 = vmatpush1.msra.mxu0 0.0
    %1603 = vmatprep.subr.mxu0 0.0
    %1604 = vmatpush1.msra.mxu0 0.0
    %1605 = vmatprep.subr.mxu0 0.0
    %1606 = vmatpush1.msra.mxu0 0.0
    %1607 = vmatprep.mubr.f32.mxu0 0.0
    %1608 = vmatmul.mubr.f32.gmra.mrb[0].mxu0 %v1541
    %v1609 = vpop.f32.mrb[0].mxu0
    %v1610 = vadd.f32 0.0, %v1609
    %v1611 = vpop.f32.mrb[0].mxu0
    %1612 = vdwg.mxu0
    %v1614 = vrot.slane %v1610, 1
    %1615 = vrot.lane.b32.xlu0 %v1614, 32
    %v1616 = vpop.permute.xlu0 %1615
    %v1618 = vsel %vm189, %v1610, %v1616
    %v1620 = vrot.slane %v1618, 7
    %vm1622 = vcmask 1040384
    %v1623 = vsel %vm1622, %v1481, %v1620
    %v1624 = vld [vmem:[%s11] sm:$0xff]
    %v1625 = vld [vmem:[%s11 + $0x8] sm:$0xff]
    %v1626 = vld [vmem:[%s11 + $0x10] sm:$0xff]
    %v1627 = vld [vmem:[%s11 + $0x18] sm:$0xff]
    %v1628 = vld [vmem:[%s11 + $0x20] sm:$0xff]
    %v1629 = vld [vmem:[%s11 + $0x28] sm:$0xff]
    %v1630 = vld [vmem:[%s11 + $0x30] sm:$0xff]
    %v1631 = vld [vmem:[%s11 + $0x38] sm:$0xff]
    %v1632 = vld [vmem:[%s12] sm:$0x1]
    %v1634 = vlaneseq
    %v1635 = vshrl.u32 %v1634, 7
    %v1636 = vsub.s32 0, %v1635
    %v1637 = vrot.slane %v1632, %v1636
    %vm1639 = vcmask 523264
    %v1641 = vsel %vm1639, %v1623, 0
    %1643 = vmatprep.subr.mxu0 0.0
    %1644 = vmatpush1.msra.mxu0 %v1624
    %1645 = vmatprep.subr.mxu0 0.0
    %1646 = vmatpush1.msra.mxu0 %v1625
    %1647 = vmatprep.subr.mxu0 0.0
    %1648 = vmatpush1.msra.mxu0 %v1626
    %1649 = vmatprep.subr.mxu0 0.0
    %1650 = vmatpush1.msra.mxu0 %v1627
    %1651 = vmatprep.subr.mxu0 0.0
    %1652 = vmatpush1.msra.mxu0 %v1628
    %1653 = vmatprep.subr.mxu0 0.0
    %1654 = vmatpush1.msra.mxu0 %v1629
    %1655 = vmatprep.subr.mxu0 0.0
    %1656 = vmatpush1.msra.mxu0 %v1630
    %1657 = vmatprep.subr.mxu0 0.0
    %1658 = vmatpush1.msra.mxu0 %v1631
    %1659 = vmatprep.subr.mxu0 0.0
    %1660 = vmatpush1.msra.mxu0 0.0
    %1661 = vmatprep.subr.mxu0 0.0
    %1662 = vmatpush1.msra.mxu0 0.0
    %1663 = vmatprep.subr.mxu0 0.0
    %1664 = vmatpush1.msra.mxu0 0.0
    %1665 = vmatprep.subr.mxu0 0.0
    %1666 = vmatpush1.msra.mxu0 0.0
    %1667 = vmatprep.subr.mxu0 0.0
    %1668 = vmatpush1.msra.mxu0 0.0
    %1669 = vmatprep.subr.mxu0 0.0
    %1670 = vmatpush1.msra.mxu0 0.0
    %1671 = vmatprep.subr.mxu0 0.0
    %1672 = vmatpush1.msra.mxu0 0.0
    %1673 = vmatprep.subr.mxu0 0.0
    %1674 = vmatpush1.msra.mxu0 0.0
    %1675 = vmatprep.subr.mxu0 0.0
    %1676 = vmatpush1.msra.mxu0 0.0
    %1677 = vmatprep.subr.mxu0 0.0
    %1678 = vmatpush1.msra.mxu0 0.0
    %1679 = vmatprep.subr.mxu0 0.0
    %1680 = vmatpush1.msra.mxu0 0.0
    %1681 = vmatprep.subr.mxu0 0.0
    %1682 = vmatpush1.msra.mxu0 0.0
    %1683 = vmatprep.subr.mxu0 0.0
    %1684 = vmatpush1.msra.mxu0 0.0
    %1685 = vmatprep.subr.mxu0 0.0
    %1686 = vmatpush1.msra.mxu0 0.0
    %1687 = vmatprep.subr.mxu0 0.0
    %1688 = vmatpush1.msra.mxu0 0.0
    %1689 = vmatprep.subr.mxu0 0.0
    %1690 = vmatpush1.msra.mxu0 0.0
    %1691 = vmatprep.subr.mxu0 0.0
    %1692 = vmatpush1.msra.mxu0 0.0
    %1693 = vmatprep.subr.mxu0 0.0
    %1694 = vmatpush1.msra.mxu0 0.0
    %1695 = vmatprep.subr.mxu0 0.0
    %1696 = vmatpush1.msra.mxu0 0.0
    %1697 = vmatprep.subr.mxu0 0.0
    %1698 = vmatpush1.msra.mxu0 0.0
    %1699 = vmatprep.subr.mxu0 0.0
    %1700 = vmatpush1.msra.mxu0 0.0
    %1701 = vmatprep.subr.mxu0 0.0
    %1702 = vmatpush1.msra.mxu0 0.0
    %1703 = vmatprep.subr.mxu0 0.0
    %1704 = vmatpush1.msra.mxu0 0.0
    %1705 = vmatprep.subr.mxu0 0.0
    %1706 = vmatpush1.msra.mxu0 0.0
    %1707 = vmatprep.mubr.f32.mxu0 0.0
    %1708 = vmatmul.mubr.f32.gmra.mrb[0].mxu0 %v1641
    %v1709 = vpop.f32.mrb[0].mxu0
    %v1710 = vadd.f32 %v1637, %v1709
    %v1711 = vpop.f32.mrb[0].mxu0
    %1712 = vdwg.mxu0
    %vm1713 = vcmask 9216
    %v1714 = vsel %vm1713, %v1710, -inf
    %1715 = vmax.xlane.f32.xlu0 %v1714
    %v1716 = vpop.xlane.xlu0 %1715
    %v1717 = vsub.f32 %v1710, %v1716
    %v1718 = vmul.f32 %v1717, 1.442695
    %v1719 = vpow.pop %v1718
    %v1720 = vsel %vm1713, %v1719, 0.0
    %1721 = vadd.xlane.f32.xlu0 %v1720
    %v1722 = vpop.xlane.xlu0 %1721
    %v1723 = vrcp.pop %v1722
    %v1724 = vmul.f32 %v1719, %v1723
    %1725 = vst.msk [vmem:[#allocation7] sm:$0x3] %vm1713, %v1724
    // Predicated region
    $region58: #{eeap_forward.1} parent=1 // pred_check
      _
    $region59: #{eeap_forward.1} parent=1 // pred_check_branch
      %1727 = sbr.rel (0) target = $region61
    $region60: #{eeap_forward.1} parent=1 // pred_region
      %s1729 = ssub.s32 32, 32
      %1730 = vsyncadd [#allocation5], %s1729
      %s1732 = sshll.u32 [#allocation7], 4
      %s1733 = int_to_ptr.vmem [resolvable:$true] %s1732
      %1735 = dma.vmem_to_hbm [thread:$0]  %s1733, 32, %s13, [#allocation5]
    $region61: #{eeap_forward.1} parent=1 // pred_fallthru
      _
    // Predicated region
    $region62: #{eeap_forward.1} parent=1 // pred_check
      _
    $region63: #{eeap_forward.1} parent=1 // pred_check_branch
      %1737 = sbr.rel (0) target = $region65
    $region64: #{eeap_forward.1} parent=1 // pred_region
      %1738 = dma.done [#allocation5], 32
    $region65: #{eeap_forward.1} parent=1 // pred_fallthru
      _
    %1739 = vsyncpa [#allocation5], 1
    %1740 = vsyncpa [#allocation6], 1

</llo_original>
